<compile_context>
chip_gen: v6e
topology: v6e:2x2x1
jax: 0.10.0
libtpu: 0.0.40
codegen_flags: <defaults>
</compile_context>

<pallas_src>
import functools

import jax
import jax.numpy as jnp
from jax.experimental import pallas as pl
from jax.experimental.pallas import tpu as pltpu


# Row indices inside the packed (8, Dq) f32 parameter-row block.
_LIN_B, _OUT_B, _N1G, _N1B, _N2G, _N2B, _FF2_B = range(7)


def _layernorm_f32(h, gamma, beta, eps=1e-5):
    m = jnp.mean(h, axis=-1, keepdims=True)
    var = jnp.mean((h - m) ** 2, axis=-1, keepdims=True)
    return (h - m) * jax.lax.rsqrt(var + eps) * gamma + beta


# ------------------------------- fused kernel ------------------------------- #

def _gsa_kernel(x_ref, objs_ref, lin_w_ref, qkv_w_ref, out_w_ref, ff1_w_ref,
                ff2_w_ref, rows_ref, ffb_ref, gates_ref, o_ref,
                *, n_heads, d_head, n_visual, n_objs):
    f32, bf16 = jnp.float32, jnp.bfloat16
    bb, _, dq = x_ref.shape                       # batches handled by this grid step
    inner = n_heads * d_head
    seq = n_visual + n_objs
    ff = ff2_w_ref.shape[0]                        # GEGLU hidden dim (lane-tile = 128)

    rows = rows_ref[...]                           # packed f32 bias / gamma / beta rows
    lin_b, out_b = rows[_LIN_B:_LIN_B + 1, :], rows[_OUT_B:_OUT_B + 1, :]
    n1g, n1b = rows[_N1G:_N1G + 1, :], rows[_N1B:_N1B + 1, :]
    n2g, n2b = rows[_N2G:_N2G + 1, :], rows[_N2B:_N2B + 1, :]
    ff2_b = rows[_FF2_B:_FF2_B + 1, :]

    x2 = x_ref[...].reshape(bb * n_visual, dq)     # (bb*Nv, Dq) f32

    # objs = self.linear(objs)  -- batch folded into matmul rows
    objs2 = objs_ref[...].reshape(bb * n_objs, -1)
    objs_p = (jnp.dot(objs2.astype(bf16), lin_w_ref[...],
                      preferred_element_type=f32) + lin_b)        # (bb*No, Dq)

    # norm1(cat([x, objs], dim=1)) -- per-batch sublane-aligned concat (Nv, No mult of 8)
    cat = jnp.concatenate(
        [part for b in range(bb)
         for part in (x2[b * n_visual:(b + 1) * n_visual, :],
                      objs_p[b * n_objs:(b + 1) * n_objs, :])], axis=0)  # (bb*S, Dq)
    n1 = _layernorm_f32(cat, n1g, n1b).astype(bf16)

    # fused QKV projection (softmax scale already folded into the q weights)
    qkv = jnp.dot(n1, qkv_w_ref[...],
                  preferred_element_type=f32).astype(bf16)        # (bb*S, 3*inner)

    # attention core: tiny per-batch / per-head (S,S) softmax; rest is batched.
    out_heads = []
    for b in range(bb):
        r0 = b * seq
        q_b = qkv[r0:r0 + seq, 0:inner]
        k_b = qkv[r0:r0 + seq, inner:2 * inner]
        v_b = qkv[r0:r0 + seq, 2 * inner:3 * inner]
        heads = []
        for h in range(n_heads):
            c0 = h * d_head
            s = jax.lax.dot_general(q_b[:, c0:c0 + d_head], k_b[:, c0:c0 + d_head],
                                    (((1,), (1,)), ((), ())),
                                    preferred_element_type=f32)    # (S, S)
            s = s - jnp.max(s, axis=-1, keepdims=True)
            p = jnp.exp(s)
            p = p * pl.reciprocal(jnp.sum(p, axis=-1, keepdims=True), approx=True)
            heads.append(jnp.dot(p.astype(bf16), v_b[:, c0:c0 + d_head],
                                 preferred_element_type=f32))      # (S, Dh)
        out_heads.append(jnp.concatenate(heads, axis=-1))          # (S, inner)
    o_heads = jnp.concatenate(out_heads, axis=0).astype(bf16)      # (bb*S, inner)

    # single fused output projection across all batches / heads
    attn = jnp.dot(o_heads, out_w_ref[...], preferred_element_type=f32) + out_b

    # x = x + tanh(alpha_attn) * attn(...)[:, :n_visual, :]  (SMEM scalar gate)
    attn_vis = jnp.concatenate(
        [attn[b * seq:b * seq + n_visual, :] for b in range(bb)], axis=0)  # (bb*Nv, Dq)
    x_mid = x2 + gates_ref[0] * attn_vis

    # feed-forward: norm2 -> GEGLU (single (Dq,2F) matmul; lane-aligned split) -> linear
    n2 = _layernorm_f32(x_mid, n2g, n2b).astype(bf16)
    proj = jnp.dot(n2, ff1_w_ref[...], preferred_element_type=f32)  # (bb*Nv, 2F)
    val = proj[:, :ff] + ffb_ref[0:1, :]
    gate = proj[:, ff:] + ffb_ref[1:2, :]
    gelu = 0.5 * gate * (1.0 + jax.lax.erf(gate * 0.7071067811865476))  # exact GELU (GEGLU)
    hidden = (val * gelu).astype(bf16)
    ff_out = jnp.dot(hidden, ff2_w_ref[...], preferred_element_type=f32) + ff2_b

    # x = x + tanh(alpha_dense) * ff(...)
    o_ref[...] = (x_mid + gates_ref[1] * ff_out).reshape(bb, n_visual, dq).astype(o_ref.dtype)
    # TODO(synk): Attention / FeedForward nn.Dropout layers are identity (p=0 / eval) and omitted.


# ------------------------------ wrapper (call) ------------------------------ #

def gated_self_attention_dense(x, objs, params, *, n_heads, d_head, batch_block=None):
    B, Nv, Dq = x.shape
    _, No, Dc = objs.shape
    inner = n_heads * d_head
    S = Nv + No
    F = params["ff2_w"].shape[0]                   # GEGLU hidden dim
    scale = float(d_head) ** -0.5
    f32, bf16 = jnp.float32, jnp.bfloat16

    # Grid choice: single-TC chips (v5e/v6e) -> one grid step covering all batches
    # (per-step overhead dominates at these shapes); v7x -> 2 parallel steps so both
    # TensorCores are used.
    if batch_block is None:
        try:
            kind = jax.devices()[0].device_kind.lower()
        except Exception:
            kind = ""
        batch_block = max(1, pl.cdiv(B, 2)) if ("v7" in kind and B > 1) else B
    if B % batch_block != 0:
        batch_block = B
    n_steps = B // batch_block

    # One-time trace-level weight repacking; matmul weights stored bf16.
    # Softmax scale folded into the q weights (exact for power-of-two scales).
    qkv_w = jnp.concatenate([params["q_w"] * scale, params["k_w"], params["v_w"]],
                            axis=1).astype(bf16)                  # (Dq, 3*inner)
    out_w = params["out_w"].astype(bf16)                          # (inner, Dq)
    lin_w = params["lin_w"].astype(bf16)                          # (Dc, Dq)
    ff1_w = params["ff1_w"].astype(bf16)                          # (Dq, 2F) value|gate
    ff2_w = params["ff2_w"].astype(bf16)                          # (F, Dq)

    rows = jnp.concatenate([                                       # packed f32 rows (8, Dq)
        params["lin_b"].reshape(1, Dq), params["out_b"].reshape(1, Dq),
        params["norm1_g"].reshape(1, Dq), params["norm1_b"].reshape(1, Dq),
        params["norm2_g"].reshape(1, Dq), params["norm2_b"].reshape(1, Dq),
        params["ff2_b"].reshape(1, Dq), jnp.zeros((1, Dq), f32)], axis=0).astype(f32)
    ffb = jnp.stack([params["ff1_b"][:F], params["ff1_b"][F:]], axis=0).astype(f32)  # (2, F)
    gates = jnp.tanh(jnp.stack([params["alpha_attn"],
                                params["alpha_dense"]])).astype(f32)  # (2,) SMEM scalars

    ins = (x, objs, lin_w, qkv_w, out_w, ff1_w, ff2_w, rows, ffb, gates)

    flops = int(2 * B * (No * Dc * Dq + S * Dq * 3 * inner
                         + n_heads * 2 * S * S * d_head + S * inner * Dq
                         + Nv * Dq * 2 * F + Nv * F * Dq))
    transcendentals = int(B * (n_heads * S * S + Nv * F))
    bytes_accessed = int(sum(int(a.size) * a.dtype.itemsize for a in ins)
                         + B * Nv * Dq * 4)

    def const_spec(shape):
        zero = (0,) * len(shape)
        return pl.BlockSpec(shape, lambda b, _z=zero: _z)

    kernel = functools.partial(_gsa_kernel, n_heads=n_heads, d_head=d_head,
                               n_visual=Nv, n_objs=No)

    return pl.pallas_call(
        kernel,
        grid=(n_steps,),
        in_specs=[
            pl.BlockSpec((batch_block, Nv, Dq), lambda b: (b, 0, 0)),   # x
            pl.BlockSpec((batch_block, No, Dc), lambda b: (b, 0, 0)),   # objs
            const_spec((Dc, Dq)),                                        # linear weight
            const_spec((Dq, 3 * inner)),                                 # fused QKV weight
            const_spec((inner, Dq)),                                     # out-proj weight
            const_spec((Dq, 2 * F)),                                     # GEGLU value|gate weight
            const_spec((F, Dq)),                                         # FF out weight
            const_spec((8, Dq)),                                         # packed bias/γ/β rows
            const_spec((2, F)),                                          # GEGLU biases
            pl.BlockSpec(memory_space=pltpu.MemorySpace.SMEM),           # tanh(alpha) gates
        ],
        out_specs=pl.BlockSpec((batch_block, Nv, Dq), lambda b: (b, 0, 0)),
        out_shape=jax.ShapeDtypeStruct((B, Nv, Dq), f32),
        compiler_params=pltpu.CompilerParams(
            dimension_semantics=("parallel",),
            vmem_limit_bytes=32 * 1024 * 1024),
        cost_estimate=pl.CostEstimate(flops=flops,
                                      transcendentals=transcendentals,
                                      bytes_accessed=bytes_accessed),
    )(*ins)


# ------------------------------ pure-JAX reference --------------------------- #

def reference(x, objs, p, *, n_heads, d_head, matmul_dtype=jnp.float32):
    f32 = jnp.float32

    def mm(a, b):
        return jnp.dot(a.astype(matmul_dtype), b.astype(matmul_dtype),
                       preferred_element_type=f32)

    def ln(h, g, b):
        m = h.mean(-1, keepdims=True)
        v = ((h - m) ** 2).mean(-1, keepdims=True)
        return (h - m) * jax.lax.rsqrt(v + 1e-5) * g + b

    B, Nv, Dq = x.shape
    inner = n_heads * d_head
    objs_p = mm(objs, p["lin_w"]) + p["lin_b"]
    cat = jnp.concatenate([x, objs_p], 1)
    S = cat.shape[1]
    h = ln(cat, p["norm1_g"], p["norm1_b"]).reshape(B * S, Dq)
    q = (mm(h, p["q_w"]) * (d_head ** -0.5)).reshape(B, S, n_heads, d_head).transpose(0, 2, 1, 3)
    k = mm(h, p["k_w"]).reshape(B, S, n_heads, d_head).transpose(0, 2, 1, 3)
    v = mm(h, p["v_w"]).reshape(B, S, n_heads, d_head).transpose(0, 2, 1, 3)
    s = jnp.einsum("bhqd,bhkd->bhqk", q.astype(matmul_dtype), k.astype(matmul_dtype),
                   preferred_element_type=f32)
    pa = jax.nn.softmax(s, axis=-1)
    o = jnp.einsum("bhqk,bhkd->bhqd", pa.astype(matmul_dtype), v.astype(matmul_dtype),
                   preferred_element_type=f32)
    o = o.transpose(0, 2, 1, 3).reshape(B * S, inner)
    attn = (mm(o, p["out_w"]) + p["out_b"]).reshape(B, S, Dq)
    x = x + jnp.tanh(p["alpha_attn"]) * attn[:, :Nv, :]
    h2 = ln(x, p["norm2_g"], p["norm2_b"]).reshape(B * Nv, Dq)
    proj = mm(h2, p["ff1_w"]) + p["ff1_b"]
    a, g = jnp.split(proj, 2, axis=-1)
    gg = a * (0.5 * g * (1.0 + jax.lax.erf(g * 0.7071067811865476)))
    ff = (mm(gg, p["ff2_w"]) + p["ff2_b"]).reshape(B, Nv, Dq)
    return x + jnp.tanh(p["alpha_dense"]) * ff


# ----------------------------------- main ----------------------------------- #

if __name__ == "__main__":
    query_dim, context_dim, n_heads, d_head = 32, 16, 2, 16
    B, n_visual, n_objs = 2, 16, 8
    ff_inner = query_dim * 4                     # GEGLU hidden dim (mult=4)
    inner = n_heads * d_head

    key = jax.random.PRNGKey(0)
    ks = jax.random.split(key, 12)

    def w(k, shape, s=0.1):
        return jax.random.normal(k, shape, jnp.float32) * s

    params = {
        "lin_w": w(ks[0], (context_dim, query_dim)),
        "lin_b": w(ks[1], (query_dim,)),
        "q_w": w(ks[2], (query_dim, inner)),
        "k_w": w(ks[3], (query_dim, inner)),
        "v_w": w(ks[4], (query_dim, inner)),
        "out_w": w(ks[5], (inner, query_dim)),
        "out_b": w(ks[6], (query_dim,)),
        "norm1_g": jnp.ones((query_dim,), jnp.float32),
        "norm1_b": jnp.zeros((query_dim,), jnp.float32),
        "norm2_g": jnp.ones((query_dim,), jnp.float32),
        "norm2_b": jnp.zeros((query_dim,), jnp.float32),
        "ff1_w": w(ks[7], (query_dim, 2 * ff_inner)),
        "ff1_b": w(ks[8], (2 * ff_inner,)),
        "ff2_w": w(ks[9], (ff_inner, query_dim)),
        "ff2_b": w(ks[10], (query_dim,)),
        # Module __init__ sets both alphas to 0.0 (which gates both branches off); use
        # deterministic non-zero values so the fused kernel paths affect the output.
        "alpha_attn": jnp.float32(0.5),
        "alpha_dense": jnp.float32(0.3),
    }

    kx, ko = jax.random.split(ks[11])
    x = jax.random.normal(kx, (B, n_visual, query_dim), jnp.float32)
    objs = jax.random.normal(ko, (B, n_objs, context_dim), jnp.float32)

    fwd = jax.jit(functools.partial(gated_self_attention_dense,
                                    n_heads=n_heads, d_head=d_head))
    out = jax.block_until_ready(fwd(x, objs, params))
    assert out.shape == (B, n_visual, query_dim)

    # Precision-matched reference (bf16 matmul operands, f32 accumulation / LN / softmax):
    # remaining diff = approx softmax reciprocal + accumulation-order effects.
    ref_bf16 = reference(x, objs, params, n_heads=n_heads, d_head=d_head,
                         matmul_dtype=jnp.bfloat16)
    err_bf16 = float(jnp.max(jnp.abs(out - ref_bf16)))
    assert jnp.allclose(out, ref_bf16, rtol=3e-3, atol=3e-3), err_bf16

    # Full-f32 reference sanity check (looser tolerance covers the intended bf16 drift).
    ref_f32 = reference(x, objs, params, n_heads=n_heads, d_head=d_head,
                        matmul_dtype=jnp.float32)
    err_f32 = float(jnp.max(jnp.abs(out - ref_f32)))
    assert jnp.allclose(out, ref_f32, rtol=5e-2, atol=5e-2), err_f32

    print("KERNEL_OK")
</pallas_src>

<mosaic_0001>
module attributes {stable_mosaic.version = 11 : i64} {
  func.func @_gsa_kernel(%arg0: i32, %arg1: memref<2x16x32xf32, #tpu.memory_space<vmem>>, %arg2: memref<2x8x16xf32, #tpu.memory_space<vmem>>, %arg3: memref<16x32xbf16, #tpu.memory_space<vmem>>, %arg4: memref<32x96xbf16, #tpu.memory_space<vmem>>, %arg5: memref<32x32xbf16, #tpu.memory_space<vmem>>, %arg6: memref<32x256xbf16, #tpu.memory_space<vmem>>, %arg7: memref<128x32xbf16, #tpu.memory_space<vmem>>, %arg8: memref<8x32xf32, #tpu.memory_space<vmem>>, %arg9: memref<2x128xf32, #tpu.memory_space<vmem>>, %arg10: memref<2xf32, #tpu.memory_space<smem>>, %arg11: memref<2x16x32xf32, #tpu.memory_space<vmem>>) attributes {dimension_semantics = [#tpu.dimension_semantics<parallel>], iteration_bounds = array<i64: 1>, scalar_prefetch = 0 : i64, scratch_operands = 0 : i64, tpu.core_type = #tpu.core_type<tc>, window_params = [{transform_indices = @transform_0, window_bounds = array<i64: 2, 16, 32>}, {transform_indices = @transform_1, window_bounds = array<i64: 2, 8, 16>}, {pipeline_mode = #tpu.pipeline_mode<synchronous>, transform_indices = @transform_2, window_bounds = array<i64: 16, 32>}, {pipeline_mode = #tpu.pipeline_mode<synchronous>, transform_indices = @transform_3, window_bounds = array<i64: 32, 96>}, {pipeline_mode = #tpu.pipeline_mode<synchronous>, transform_indices = @transform_4, window_bounds = array<i64: 32, 32>}, {pipeline_mode = #tpu.pipeline_mode<synchronous>, transform_indices = @transform_5, window_bounds = array<i64: 32, 256>}, {pipeline_mode = #tpu.pipeline_mode<synchronous>, transform_indices = @transform_6, window_bounds = array<i64: 128, 32>}, {pipeline_mode = #tpu.pipeline_mode<synchronous>, transform_indices = @transform_7, window_bounds = array<i64: 8, 32>}, {pipeline_mode = #tpu.pipeline_mode<synchronous>, transform_indices = @transform_8, window_bounds = array<i64: 2, 128>}, {transform_indices = @transform_9, window_bounds = array<i64: 2>}, {transform_indices = @transform_10, window_bounds = array<i64: 2, 16, 32>}]} {
    %c0 = arith.constant 0 : index
    %c0_0 = arith.constant 0 : index
    %0 = vector.load %arg8[%c0, %c0_0] : memref<8x32xf32, #tpu.memory_space<vmem>>, vector<8x32xf32>
    %1 = vector.extract_strided_slice %0 {offsets = [0, 0], sizes = [1, 32], strides = [1, 1]} : vector<8x32xf32> to vector<1x32xf32>
    %2 = vector.extract_strided_slice %0 {offsets = [1, 0], sizes = [1, 32], strides = [1, 1]} : vector<8x32xf32> to vector<1x32xf32>
    %3 = vector.extract_strided_slice %0 {offsets = [2, 0], sizes = [1, 32], strides = [1, 1]} : vector<8x32xf32> to vector<1x32xf32>
    %4 = vector.extract_strided_slice %0 {offsets = [3, 0], sizes = [1, 32], strides = [1, 1]} : vector<8x32xf32> to vector<1x32xf32>
    %5 = vector.extract_strided_slice %0 {offsets = [4, 0], sizes = [1, 32], strides = [1, 1]} : vector<8x32xf32> to vector<1x32xf32>
    %6 = vector.extract_strided_slice %0 {offsets = [5, 0], sizes = [1, 32], strides = [1, 1]} : vector<8x32xf32> to vector<1x32xf32>
    %7 = vector.extract_strided_slice %0 {offsets = [6, 0], sizes = [1, 32], strides = [1, 1]} : vector<8x32xf32> to vector<1x32xf32>
    %c0_1 = arith.constant 0 : index
    %c0_2 = arith.constant 0 : index
    %c0_3 = arith.constant 0 : index
    %8 = vector.load %arg1[%c0_1, %c0_2, %c0_3] : memref<2x16x32xf32, #tpu.memory_space<vmem>>, vector<2x16x32xf32>
    %9 = vector.shape_cast %8 : vector<2x16x32xf32> to vector<32x32xf32>
    %c0_4 = arith.constant 0 : index
    %c0_5 = arith.constant 0 : index
    %c0_6 = arith.constant 0 : index
    %10 = vector.load %arg2[%c0_4, %c0_5, %c0_6] : memref<2x8x16xf32, #tpu.memory_space<vmem>>, vector<2x8x16xf32>
    %11 = vector.shape_cast %10 : vector<2x8x16xf32> to vector<16x16xf32>
    %12 = arith.truncf %11 : vector<16x16xf32> to vector<16x16xbf16>
    %c0_7 = arith.constant 0 : index
    %c0_8 = arith.constant 0 : index
    %13 = vector.load %arg3[%c0_7, %c0_8] : memref<16x32xbf16, #tpu.memory_space<vmem>>, vector<16x32xbf16>
    %cst = arith.constant dense<0.000000e+00> : vector<16x32xf32>
    %14 = tpu.matmul %12, %13, %cst {dimension_numbers = #tpu.dot_dimension_numbers<[1], [0], [0], [1], [0, 0, 1, 1], [], []>} : vector<16x16xbf16>, vector<16x32xbf16>, vector<16x32xf32> -> vector<16x32xf32>
    %15 = vector.broadcast %1 : vector<1x32xf32> to vector<16x32xf32>
    %16 = arith.addf %14, %15 : vector<16x32xf32>
    %17 = vector.extract_strided_slice %9 {offsets = [0, 0], sizes = [16, 32], strides = [1, 1]} : vector<32x32xf32> to vector<16x32xf32>
    %18 = vector.extract_strided_slice %16 {offsets = [0, 0], sizes = [8, 32], strides = [1, 1]} : vector<16x32xf32> to vector<8x32xf32>
    %19 = vector.extract_strided_slice %9 {offsets = [16, 0], sizes = [16, 32], strides = [1, 1]} : vector<32x32xf32> to vector<16x32xf32>
    %20 = vector.extract_strided_slice %16 {offsets = [8, 0], sizes = [8, 32], strides = [1, 1]} : vector<16x32xf32> to vector<8x32xf32>
    %21 = tpu.concatenate %17, %18, %19, %20 in 0 : vector<16x32xf32>, vector<8x32xf32>, vector<16x32xf32>, vector<8x32xf32> -> vector<48x32xf32>
    %cst_9 = arith.constant dense<0.000000e+00> : vector<48xf32>
    %22 = vector.multi_reduction <add>, %21, %cst_9 [1] : vector<48x32xf32> to vector<48xf32>
    %23 = vector.shape_cast %22 : vector<48xf32> to vector<48x1xf32>
    %cst_10 = arith.constant 3.200000e+01 : f32
    %24 = vector.broadcast %cst_10 : f32 to vector<48x1xf32>
    %25 = arith.divf %23, %24 : vector<48x1xf32>
    %26 = vector.broadcast %25 : vector<48x1xf32> to vector<48x32xf32>
    %27 = arith.subf %21, %26 : vector<48x32xf32>
    %28 = arith.mulf %27, %27 : vector<48x32xf32>
    %cst_11 = arith.constant dense<0.000000e+00> : vector<48xf32>
    %29 = vector.multi_reduction <add>, %28, %cst_11 [1] : vector<48x32xf32> to vector<48xf32>
    %30 = vector.shape_cast %29 : vector<48xf32> to vector<48x1xf32>
    %cst_12 = arith.constant 3.200000e+01 : f32
    %31 = vector.broadcast %cst_12 : f32 to vector<48x1xf32>
    %32 = arith.divf %30, %31 : vector<48x1xf32>
    %33 = vector.broadcast %25 : vector<48x1xf32> to vector<48x32xf32>
    %34 = arith.subf %21, %33 : vector<48x32xf32>
    %cst_13 = arith.constant 9.99999974E-6 : f32
    %35 = vector.broadcast %cst_13 : f32 to vector<48x1xf32>
    %36 = arith.addf %32, %35 : vector<48x1xf32>
    %37 = math.rsqrt %36 : vector<48x1xf32>
    %38 = vector.broadcast %37 : vector<48x1xf32> to vector<48x32xf32>
    %39 = arith.mulf %34, %38 : vector<48x32xf32>
    %40 = vector.broadcast %3 : vector<1x32xf32> to vector<48x32xf32>
    %41 = arith.mulf %39, %40 : vector<48x32xf32>
    %42 = vector.broadcast %4 : vector<1x32xf32> to vector<48x32xf32>
    %43 = arith.addf %41, %42 : vector<48x32xf32>
    %44 = arith.truncf %43 : vector<48x32xf32> to vector<48x32xbf16>
    %c0_14 = arith.constant 0 : index
    %c0_15 = arith.constant 0 : index
    %45 = vector.load %arg4[%c0_14, %c0_15] : memref<32x96xbf16, #tpu.memory_space<vmem>>, vector<32x96xbf16>
    %cst_16 = arith.constant dense<0.000000e+00> : vector<48x96xf32>
    %46 = tpu.matmul %44, %45, %cst_16 {dimension_numbers = #tpu.dot_dimension_numbers<[1], [0], [0], [1], [0, 0, 1, 1], [], []>} : vector<48x32xbf16>, vector<32x96xbf16>, vector<48x96xf32> -> vector<48x96xf32>
    %47 = arith.truncf %46 : vector<48x96xf32> to vector<48x96xbf16>
    %48 = vector.extract_strided_slice %47 {offsets = [0, 0], sizes = [24, 32], strides = [1, 1]} : vector<48x96xbf16> to vector<24x32xbf16>
    %49 = vector.extract_strided_slice %47 {offsets = [0, 32], sizes = [24, 32], strides = [1, 1]} : vector<48x96xbf16> to vector<24x32xbf16>
    %50 = vector.extract_strided_slice %47 {offsets = [0, 64], sizes = [24, 32], strides = [1, 1]} : vector<48x96xbf16> to vector<24x32xbf16>
    %51 = vector.extract_strided_slice %48 {offsets = [0, 0], sizes = [24, 16], strides = [1, 1]} : vector<24x32xbf16> to vector<24x16xbf16>
    %52 = vector.extract_strided_slice %49 {offsets = [0, 0], sizes = [24, 16], strides = [1, 1]} : vector<24x32xbf16> to vector<24x16xbf16>
    %cst_17 = arith.constant dense<0.000000e+00> : vector<24x24xf32>
    %53 = tpu.matmul %51, %52, %cst_17 {dimension_numbers = #tpu.dot_dimension_numbers<[1], [1], [0], [0], [0, 0, 1, 0], [], []>} : vector<24x16xbf16>, vector<24x16xbf16>, vector<24x24xf32> -> vector<24x24xf32>
    %cst_18 = arith.constant dense<0xFF800000> : vector<24xf32>
    %54 = vector.multi_reduction <maximumf>, %53, %cst_18 [1] : vector<24x24xf32> to vector<24xf32>
    %55 = vector.shape_cast %54 : vector<24xf32> to vector<24x1xf32>
    %56 = vector.broadcast %55 : vector<24x1xf32> to vector<24x24xf32>
    %57 = arith.subf %53, %56 : vector<24x24xf32>
    %58 = math.exp %57 : vector<24x24xf32>
    %cst_19 = arith.constant dense<0.000000e+00> : vector<24xf32>
    %59 = vector.multi_reduction <add>, %58, %cst_19 [1] : vector<24x24xf32> to vector<24xf32>
    %60 = vector.shape_cast %59 : vector<24xf32> to vector<24x1xf32>
    %61 = tpu.reciprocal %60 {approx = true} : vector<24x1xf32> -> vector<24x1xf32>
    %62 = vector.broadcast %61 : vector<24x1xf32> to vector<24x24xf32>
    %63 = arith.mulf %58, %62 : vector<24x24xf32>
    %64 = arith.truncf %63 : vector<24x24xf32> to vector<24x24xbf16>
    %65 = vector.extract_strided_slice %50 {offsets = [0, 0], sizes = [24, 16], strides = [1, 1]} : vector<24x32xbf16> to vector<24x16xbf16>
    %cst_20 = arith.constant dense<0.000000e+00> : vector<24x16xf32>
    %66 = tpu.matmul %64, %65, %cst_20 {dimension_numbers = #tpu.dot_dimension_numbers<[1], [0], [0], [1], [0, 0, 1, 1], [], []>} : vector<24x24xbf16>, vector<24x16xbf16>, vector<24x16xf32> -> vector<24x16xf32>
    %67 = vector.extract_strided_slice %48 {offsets = [0, 16], sizes = [24, 16], strides = [1, 1]} : vector<24x32xbf16> to vector<24x16xbf16>
    %68 = vector.extract_strided_slice %49 {offsets = [0, 16], sizes = [24, 16], strides = [1, 1]} : vector<24x32xbf16> to vector<24x16xbf16>
    %cst_21 = arith.constant dense<0.000000e+00> : vector<24x24xf32>
    %69 = tpu.matmul %67, %68, %cst_21 {dimension_numbers = #tpu.dot_dimension_numbers<[1], [1], [0], [0], [0, 0, 1, 0], [], []>} : vector<24x16xbf16>, vector<24x16xbf16>, vector<24x24xf32> -> vector<24x24xf32>
    %cst_22 = arith.constant dense<0xFF800000> : vector<24xf32>
    %70 = vector.multi_reduction <maximumf>, %69, %cst_22 [1] : vector<24x24xf32> to vector<24xf32>
    %71 = vector.shape_cast %70 : vector<24xf32> to vector<24x1xf32>
    %72 = vector.broadcast %71 : vector<24x1xf32> to vector<24x24xf32>
    %73 = arith.subf %69, %72 : vector<24x24xf32>
    %74 = math.exp %73 : vector<24x24xf32>
    %cst_23 = arith.constant dense<0.000000e+00> : vector<24xf32>
    %75 = vector.multi_reduction <add>, %74, %cst_23 [1] : vector<24x24xf32> to vector<24xf32>
    %76 = vector.shape_cast %75 : vector<24xf32> to vector<24x1xf32>
    %77 = tpu.reciprocal %76 {approx = true} : vector<24x1xf32> -> vector<24x1xf32>
    %78 = vector.broadcast %77 : vector<24x1xf32> to vector<24x24xf32>
    %79 = arith.mulf %74, %78 : vector<24x24xf32>
    %80 = arith.truncf %79 : vector<24x24xf32> to vector<24x24xbf16>
    %81 = vector.extract_strided_slice %50 {offsets = [0, 16], sizes = [24, 16], strides = [1, 1]} : vector<24x32xbf16> to vector<24x16xbf16>
    %cst_24 = arith.constant dense<0.000000e+00> : vector<24x16xf32>
    %82 = tpu.matmul %80, %81, %cst_24 {dimension_numbers = #tpu.dot_dimension_numbers<[1], [0], [0], [1], [0, 0, 1, 1], [], []>} : vector<24x24xbf16>, vector<24x16xbf16>, vector<24x16xf32> -> vector<24x16xf32>
    %83 = tpu.concatenate %66, %82 in 1 : vector<24x16xf32>, vector<24x16xf32> -> vector<24x32xf32>
    %84 = vector.extract_strided_slice %47 {offsets = [24, 0], sizes = [24, 32], strides = [1, 1]} : vector<48x96xbf16> to vector<24x32xbf16>
    %85 = vector.extract_strided_slice %47 {offsets = [24, 32], sizes = [24, 32], strides = [1, 1]} : vector<48x96xbf16> to vector<24x32xbf16>
    %86 = vector.extract_strided_slice %47 {offsets = [24, 64], sizes = [24, 32], strides = [1, 1]} : vector<48x96xbf16> to vector<24x32xbf16>
    %87 = vector.extract_strided_slice %84 {offsets = [0, 0], sizes = [24, 16], strides = [1, 1]} : vector<24x32xbf16> to vector<24x16xbf16>
    %88 = vector.extract_strided_slice %85 {offsets = [0, 0], sizes = [24, 16], strides = [1, 1]} : vector<24x32xbf16> to vector<24x16xbf16>
    %cst_25 = arith.constant dense<0.000000e+00> : vector<24x24xf32>
    %89 = tpu.matmul %87, %88, %cst_25 {dimension_numbers = #tpu.dot_dimension_numbers<[1], [1], [0], [0], [0, 0, 1, 0], [], []>} : vector<24x16xbf16>, vector<24x16xbf16>, vector<24x24xf32> -> vector<24x24xf32>
    %cst_26 = arith.constant dense<0xFF800000> : vector<24xf32>
    %90 = vector.multi_reduction <maximumf>, %89, %cst_26 [1] : vector<24x24xf32> to vector<24xf32>
    %91 = vector.shape_cast %90 : vector<24xf32> to vector<24x1xf32>
    %92 = vector.broadcast %91 : vector<24x1xf32> to vector<24x24xf32>
    %93 = arith.subf %89, %92 : vector<24x24xf32>
    %94 = math.exp %93 : vector<24x24xf32>
    %cst_27 = arith.constant dense<0.000000e+00> : vector<24xf32>
    %95 = vector.multi_reduction <add>, %94, %cst_27 [1] : vector<24x24xf32> to vector<24xf32>
    %96 = vector.shape_cast %95 : vector<24xf32> to vector<24x1xf32>
    %97 = tpu.reciprocal %96 {approx = true} : vector<24x1xf32> -> vector<24x1xf32>
    %98 = vector.broadcast %97 : vector<24x1xf32> to vector<24x24xf32>
    %99 = arith.mulf %94, %98 : vector<24x24xf32>
    %100 = arith.truncf %99 : vector<24x24xf32> to vector<24x24xbf16>
    %101 = vector.extract_strided_slice %86 {offsets = [0, 0], sizes = [24, 16], strides = [1, 1]} : vector<24x32xbf16> to vector<24x16xbf16>
    %cst_28 = arith.constant dense<0.000000e+00> : vector<24x16xf32>
    %102 = tpu.matmul %100, %101, %cst_28 {dimension_numbers = #tpu.dot_dimension_numbers<[1], [0], [0], [1], [0, 0, 1, 1], [], []>} : vector<24x24xbf16>, vector<24x16xbf16>, vector<24x16xf32> -> vector<24x16xf32>
    %103 = vector.extract_strided_slice %84 {offsets = [0, 16], sizes = [24, 16], strides = [1, 1]} : vector<24x32xbf16> to vector<24x16xbf16>
    %104 = vector.extract_strided_slice %85 {offsets = [0, 16], sizes = [24, 16], strides = [1, 1]} : vector<24x32xbf16> to vector<24x16xbf16>
    %cst_29 = arith.constant dense<0.000000e+00> : vector<24x24xf32>
    %105 = tpu.matmul %103, %104, %cst_29 {dimension_numbers = #tpu.dot_dimension_numbers<[1], [1], [0], [0], [0, 0, 1, 0], [], []>} : vector<24x16xbf16>, vector<24x16xbf16>, vector<24x24xf32> -> vector<24x24xf32>
    %cst_30 = arith.constant dense<0xFF800000> : vector<24xf32>
    %106 = vector.multi_reduction <maximumf>, %105, %cst_30 [1] : vector<24x24xf32> to vector<24xf32>
    %107 = vector.shape_cast %106 : vector<24xf32> to vector<24x1xf32>
    %108 = vector.broadcast %107 : vector<24x1xf32> to vector<24x24xf32>
    %109 = arith.subf %105, %108 : vector<24x24xf32>
    %110 = math.exp %109 : vector<24x24xf32>
    %cst_31 = arith.constant dense<0.000000e+00> : vector<24xf32>
    %111 = vector.multi_reduction <add>, %110, %cst_31 [1] : vector<24x24xf32> to vector<24xf32>
    %112 = vector.shape_cast %111 : vector<24xf32> to vector<24x1xf32>
    %113 = tpu.reciprocal %112 {approx = true} : vector<24x1xf32> -> vector<24x1xf32>
    %114 = vector.broadcast %113 : vector<24x1xf32> to vector<24x24xf32>
    %115 = arith.mulf %110, %114 : vector<24x24xf32>
    %116 = arith.truncf %115 : vector<24x24xf32> to vector<24x24xbf16>
    %117 = vector.extract_strided_slice %86 {offsets = [0, 16], sizes = [24, 16], strides = [1, 1]} : vector<24x32xbf16> to vector<24x16xbf16>
    %cst_32 = arith.constant dense<0.000000e+00> : vector<24x16xf32>
    %118 = tpu.matmul %116, %117, %cst_32 {dimension_numbers = #tpu.dot_dimension_numbers<[1], [0], [0], [1], [0, 0, 1, 1], [], []>} : vector<24x24xbf16>, vector<24x16xbf16>, vector<24x16xf32> -> vector<24x16xf32>
    %119 = tpu.concatenate %102, %118 in 1 : vector<24x16xf32>, vector<24x16xf32> -> vector<24x32xf32>
    %120 = tpu.concatenate %83, %119 in 0 : vector<24x32xf32>, vector<24x32xf32> -> vector<48x32xf32>
    %121 = arith.truncf %120 : vector<48x32xf32> to vector<48x32xbf16>
    %c0_33 = arith.constant 0 : index
    %c0_34 = arith.constant 0 : index
    %122 = vector.load %arg5[%c0_33, %c0_34] : memref<32x32xbf16, #tpu.memory_space<vmem>>, vector<32x32xbf16>
    %cst_35 = arith.constant dense<0.000000e+00> : vector<48x32xf32>
    %123 = tpu.matmul %121, %122, %cst_35 {dimension_numbers = #tpu.dot_dimension_numbers<[1], [0], [0], [1], [0, 0, 1, 1], [], []>} : vector<48x32xbf16>, vector<32x32xbf16>, vector<48x32xf32> -> vector<48x32xf32>
    %124 = vector.broadcast %2 : vector<1x32xf32> to vector<48x32xf32>
    %125 = arith.addf %123, %124 : vector<48x32xf32>
    %126 = vector.extract_strided_slice %125 {offsets = [0, 0], sizes = [16, 32], strides = [1, 1]} : vector<48x32xf32> to vector<16x32xf32>
    %127 = vector.extract_strided_slice %125 {offsets = [24, 0], sizes = [16, 32], strides = [1, 1]} : vector<48x32xf32> to vector<16x32xf32>
    %128 = tpu.concatenate %126, %127 in 0 : vector<16x32xf32>, vector<16x32xf32> -> vector<32x32xf32>
    %c0_36 = arith.constant 0 : index
    %129 = memref.load %arg10[%c0_36] : memref<2xf32, #tpu.memory_space<smem>>
    %130 = vector.broadcast %129 : f32 to vector<32x32xf32>
    %131 = arith.mulf %130, %128 : vector<32x32xf32>
    %132 = arith.addf %9, %131 : vector<32x32xf32>
    %cst_37 = arith.constant dense<0.000000e+00> : vector<32xf32>
    %133 = vector.multi_reduction <add>, %132, %cst_37 [1] : vector<32x32xf32> to vector<32xf32>
    %134 = vector.shape_cast %133 : vector<32xf32> to vector<32x1xf32>
    %cst_38 = arith.constant 3.200000e+01 : f32
    %135 = vector.broadcast %cst_38 : f32 to vector<32x1xf32>
    %136 = arith.divf %134, %135 : vector<32x1xf32>
    %137 = vector.broadcast %136 : vector<32x1xf32> to vector<32x32xf32>
    %138 = arith.subf %132, %137 : vector<32x32xf32>
    %139 = arith.mulf %138, %138 : vector<32x32xf32>
    %cst_39 = arith.constant dense<0.000000e+00> : vector<32xf32>
    %140 = vector.multi_reduction <add>, %139, %cst_39 [1] : vector<32x32xf32> to vector<32xf32>
    %141 = vector.shape_cast %140 : vector<32xf32> to vector<32x1xf32>
    %cst_40 = arith.constant 3.200000e+01 : f32
    %142 = vector.broadcast %cst_40 : f32 to vector<32x1xf32>
    %143 = arith.divf %141, %142 : vector<32x1xf32>
    %144 = vector.broadcast %136 : vector<32x1xf32> to vector<32x32xf32>
    %145 = arith.subf %132, %144 : vector<32x32xf32>
    %cst_41 = arith.constant 9.99999974E-6 : f32
    %146 = vector.broadcast %cst_41 : f32 to vector<32x1xf32>
    %147 = arith.addf %143, %146 : vector<32x1xf32>
    %148 = math.rsqrt %147 : vector<32x1xf32>
    %149 = vector.broadcast %148 : vector<32x1xf32> to vector<32x32xf32>
    %150 = arith.mulf %145, %149 : vector<32x32xf32>
    %151 = vector.broadcast %5 : vector<1x32xf32> to vector<32x32xf32>
    %152 = arith.mulf %150, %151 : vector<32x32xf32>
    %153 = vector.broadcast %6 : vector<1x32xf32> to vector<32x32xf32>
    %154 = arith.addf %152, %153 : vector<32x32xf32>
    %155 = arith.truncf %154 : vector<32x32xf32> to vector<32x32xbf16>
    %c0_42 = arith.constant 0 : index
    %c0_43 = arith.constant 0 : index
    %156 = vector.load %arg6[%c0_42, %c0_43] : memref<32x256xbf16, #tpu.memory_space<vmem>>, vector<32x256xbf16>
    %cst_44 = arith.constant dense<0.000000e+00> : vector<32x256xf32>
    %157 = tpu.matmul %155, %156, %cst_44 {dimension_numbers = #tpu.dot_dimension_numbers<[1], [0], [0], [1], [0, 0, 1, 1], [], []>} : vector<32x32xbf16>, vector<32x256xbf16>, vector<32x256xf32> -> vector<32x256xf32>
    %158 = vector.extract_strided_slice %157 {offsets = [0, 0], sizes = [32, 128], strides = [1, 1]} : vector<32x256xf32> to vector<32x128xf32>
    %c0_45 = arith.constant 0 : index
    %c0_46 = arith.constant 0 : index
    %159 = vector.load %arg9[%c0_45, %c0_46] : memref<2x128xf32, #tpu.memory_space<vmem>>, vector<1x128xf32>
    %160 = vector.broadcast %159 : vector<1x128xf32> to vector<32x128xf32>
    %161 = arith.addf %158, %160 : vector<32x128xf32>
    %162 = vector.extract_strided_slice %157 {offsets = [0, 128], sizes = [32, 128], strides = [1, 1]} : vector<32x256xf32> to vector<32x128xf32>
    %c1 = arith.constant 1 : index
    %c0_47 = arith.constant 0 : index
    %163 = vector.load %arg9[%c1, %c0_47] : memref<2x128xf32, #tpu.memory_space<vmem>>, vector<1x128xf32>
    %164 = vector.broadcast %163 : vector<1x128xf32> to vector<32x128xf32>
    %165 = arith.addf %162, %164 : vector<32x128xf32>
    %cst_48 = arith.constant 5.000000e-01 : f32
    %166 = vector.broadcast %cst_48 : f32 to vector<32x128xf32>
    %167 = arith.mulf %166, %165 : vector<32x128xf32>
    %cst_49 = arith.constant 0.707106769 : f32
    %168 = vector.broadcast %cst_49 : f32 to vector<32x128xf32>
    %169 = arith.mulf %165, %168 : vector<32x128xf32>
    %170 = math.erf %169 : vector<32x128xf32>
    %cst_50 = arith.constant 1.000000e+00 : f32
    %171 = vector.broadcast %cst_50 : f32 to vector<32x128xf32>
    %172 = arith.addf %171, %170 : vector<32x128xf32>
    %173 = arith.mulf %167, %172 : vector<32x128xf32>
    %174 = arith.mulf %161, %173 : vector<32x128xf32>
    %175 = arith.truncf %174 : vector<32x128xf32> to vector<32x128xbf16>
    %c0_51 = arith.constant 0 : index
    %c0_52 = arith.constant 0 : index
    %176 = vector.load %arg7[%c0_51, %c0_52] : memref<128x32xbf16, #tpu.memory_space<vmem>>, vector<128x32xbf16>
    %cst_53 = arith.constant dense<0.000000e+00> : vector<32x32xf32>
    %177 = tpu.matmul %175, %176, %cst_53 {dimension_numbers = #tpu.dot_dimension_numbers<[1], [0], [0], [1], [0, 0, 1, 1], [], []>} : vector<32x128xbf16>, vector<128x32xbf16>, vector<32x32xf32> -> vector<32x32xf32>
    %178 = vector.broadcast %7 : vector<1x32xf32> to vector<32x32xf32>
    %179 = arith.addf %177, %178 : vector<32x32xf32>
    %c1_54 = arith.constant 1 : index
    %180 = memref.load %arg10[%c1_54] : memref<2xf32, #tpu.memory_space<smem>>
    %181 = vector.broadcast %180 : f32 to vector<32x32xf32>
    %182 = arith.mulf %181, %179 : vector<32x32xf32>
    %183 = arith.addf %132, %182 : vector<32x32xf32>
    %184 = vector.shape_cast %183 : vector<32x32xf32> to vector<2x16x32xf32>
    %c0_55 = arith.constant 0 : index
    %c0_56 = arith.constant 0 : index
    %c0_57 = arith.constant 0 : index
    %185 = vector.load %arg11[%c0_55, %c0_56, %c0_57] : memref<2x16x32xf32, #tpu.memory_space<vmem>>, vector<2x16x32xf32>
    tpu.vector_store %arg11[%c0_55, %c0_56, %c0_57], %184 {strides = array<i32>} : memref<2x16x32xf32, #tpu.memory_space<vmem>>, vector<2x16x32xf32>,
    return
  }
  func.func @transform_0(%arg0: i32) -> (i32, i32, i32) {
    %c0_i32 = arith.constant 0 : i32
    %c0_i32_0 = arith.constant 0 : i32
    %c0_i32_1 = arith.constant 0 : i32
    return %arg0, %c0_i32, %c0_i32_0 : i32, i32, i32
  }
  func.func @transform_1(%arg0: i32) -> (i32, i32, i32) {
    %c0_i32 = arith.constant 0 : i32
    %c0_i32_0 = arith.constant 0 : i32
    %c0_i32_1 = arith.constant 0 : i32
    return %arg0, %c0_i32, %c0_i32_0 : i32, i32, i32
  }
  func.func @transform_2(%arg0: i32) -> (i32, i32) {
    %c0_i32 = arith.constant 0 : i32
    %c0_i32_0 = arith.constant 0 : i32
    %c0_i32_1 = arith.constant 0 : i32
    return %c0_i32, %c0_i32_0 : i32, i32
  }
  func.func @transform_3(%arg0: i32) -> (i32, i32) {
    %c0_i32 = arith.constant 0 : i32
    %c0_i32_0 = arith.constant 0 : i32
    %c0_i32_1 = arith.constant 0 : i32
    return %c0_i32, %c0_i32_0 : i32, i32
  }
  func.func @transform_4(%arg0: i32) -> (i32, i32) {
    %c0_i32 = arith.constant 0 : i32
    %c0_i32_0 = arith.constant 0 : i32
    %c0_i32_1 = arith.constant 0 : i32
    return %c0_i32, %c0_i32_0 : i32, i32
  }
  func.func @transform_5(%arg0: i32) -> (i32, i32) {
    %c0_i32 = arith.constant 0 : i32
    %c0_i32_0 = arith.constant 0 : i32
    %c0_i32_1 = arith.constant 0 : i32
    return %c0_i32, %c0_i32_0 : i32, i32
  }
  func.func @transform_6(%arg0: i32) -> (i32, i32) {
    %c0_i32 = arith.constant 0 : i32
    %c0_i32_0 = arith.constant 0 : i32
    %c0_i32_1 = arith.constant 0 : i32
    return %c0_i32, %c0_i32_0 : i32, i32
  }
  func.func @transform_7(%arg0: i32) -> (i32, i32) {
    %c0_i32 = arith.constant 0 : i32
    %c0_i32_0 = arith.constant 0 : i32
    %c0_i32_1 = arith.constant 0 : i32
    return %c0_i32, %c0_i32_0 : i32, i32
  }
  func.func @transform_8(%arg0: i32) -> (i32, i32) {
    %c0_i32 = arith.constant 0 : i32
    %c0_i32_0 = arith.constant 0 : i32
    %c0_i32_1 = arith.constant 0 : i32
    return %c0_i32, %c0_i32_0 : i32, i32
  }
  func.func @transform_9(%arg0: i32) -> i32 {
    %c0_i32 = arith.constant 0 : i32
    %c0_i32_0 = arith.constant 0 : i32
    return %c0_i32 : i32
  }
  func.func @transform_10(%arg0: i32) -> (i32, i32, i32) {
    %c0_i32 = arith.constant 0 : i32
    %c0_i32_0 = arith.constant 0 : i32
    %c0_i32_1 = arith.constant 0 : i32
    return %arg0, %c0_i32, %c0_i32_0 : i32, i32, i32
  }
}

</mosaic_0001>

<llo_original>
// kernel: gated_self_attention_dense.1
$region0: #{gated_self_attention_dense.1}
  #allocation0 [shape = 'u32[]', space=smem, size = 0x4, offset = 0x4, fixed_abs, tag = 'smem constant byte address 0x4 - core index']
  #allocation1 [shape = 'u32[144,128]{1,0:T(1,128)}', space=vmem, size = 0x12000, scoped, tag = 'internal scratch']
  %s0 = inlined_call_operand.vmem [shape: f32[2,16,32], index: 0, kind: input, shape index: {}]
  %s1 = inlined_call_operand.vmem [shape: f32[2,8,16], index: 1, kind: input, shape index: {}]
  %s2 = inlined_call_operand.vmem [shape: bf16[16,32], index: 2, kind: input, shape index: {}]
  %s3 = inlined_call_operand.vmem [shape: bf16[32,96], index: 3, kind: input, shape index: {}]
  %s4 = inlined_call_operand.vmem [shape: bf16[32,32], index: 4, kind: input, shape index: {}]
  %s5 = inlined_call_operand.vmem [shape: bf16[32,256], index: 5, kind: input, shape index: {}]
  %s6 = inlined_call_operand.vmem [shape: bf16[128,32], index: 6, kind: input, shape index: {}]
  %s7 = inlined_call_operand.vmem [shape: f32[8,32], index: 7, kind: input, shape index: {}]
  %s8 = inlined_call_operand.vmem [shape: f32[2,128], index: 8, kind: input, shape index: {}]
  %s9 = inlined_call_operand.vmem [shape: f32[2], index: 9, kind: input, shape index: {}]
  %s10 = inlined_call_operand.hbm [shape: f32[2,16,32], index: 10, kind: output, shape index: {}]
  %s11 = sld [smem:[#allocation0]]
  $region54: #{gated_self_attention_dense.1} parent=0
    _
  %s13 = ssub.s32 1, %s11
  %s14 = scalar_select 0, %s13, %s11
  $region1: #{gated_self_attention_dense.1} parent=0
    #allocation2 [shape = 'u8[512]{0}', space=smem, size = 0x200, scoped, tag = 'input window, operand 9, single buffered']
    #allocation3 [shape = 's32[1]{0}', space=sflag, size = 0x4, scoped, tag = 'scoped memory for gated_self_attention_dense.1']
    #allocation4 [shape = 's32[1]{0}', space=sflag, size = 0x4, scoped, tag = 'scoped memory for gated_self_attention_dense.1']
    #allocation5 [shape = 'u8[16384]{0}', space=vmem, size = 0x4000, scoped, tag = 'output window, operand 0, single buffered']
    %15 = vsyncpa [#allocation4], 0
    %16 = vsyncpa [#allocation3], 0
    // Predicated region
    $region2: #{gated_self_attention_dense.1} parent=1 // pred_check
      _
    $region3: #{gated_self_attention_dense.1} parent=1 // pred_check_branch
      %18 = sbr.rel (0) target = $region5
    $region4: #{gated_self_attention_dense.1} parent=1 // pred_region
      _
    $region5: #{gated_self_attention_dense.1} parent=1 // pred_fallthru
      _
    // Predicated region
    $region6: #{gated_self_attention_dense.1} parent=1 // pred_check
      _
    $region7: #{gated_self_attention_dense.1} parent=1 // pred_check_branch
      %20 = sbr.rel (0) target = $region9
    $region8: #{gated_self_attention_dense.1} parent=1 // pred_region
      _
    $region9: #{gated_self_attention_dense.1} parent=1 // pred_fallthru
      _
    // Predicated region
    $region10: #{gated_self_attention_dense.1} parent=1 // pred_check
      _
    $region11: #{gated_self_attention_dense.1} parent=1 // pred_check_branch
      %22 = sbr.rel (0) target = $region13
    $region12: #{gated_self_attention_dense.1} parent=1 // pred_region
      _
    $region13: #{gated_self_attention_dense.1} parent=1 // pred_fallthru
      _
    // Predicated region
    $region14: #{gated_self_attention_dense.1} parent=1 // pred_check
      _
    $region15: #{gated_self_attention_dense.1} parent=1 // pred_check_branch
      %24 = sbr.rel (0) target = $region17
    $region16: #{gated_self_attention_dense.1} parent=1 // pred_region
      _
    $region17: #{gated_self_attention_dense.1} parent=1 // pred_fallthru
      _
    // Predicated region
    $region18: #{gated_self_attention_dense.1} parent=1 // pred_check
      _
    $region19: #{gated_self_attention_dense.1} parent=1 // pred_check_branch
      %26 = sbr.rel (0) target = $region21
    $region20: #{gated_self_attention_dense.1} parent=1 // pred_region
      _
    $region21: #{gated_self_attention_dense.1} parent=1 // pred_fallthru
      _
    // Predicated region
    $region22: #{gated_self_attention_dense.1} parent=1 // pred_check
      _
    $region23: #{gated_self_attention_dense.1} parent=1 // pred_check_branch
      %28 = sbr.rel (0) target = $region25
    $region24: #{gated_self_attention_dense.1} parent=1 // pred_region
      _
    $region25: #{gated_self_attention_dense.1} parent=1 // pred_fallthru
      _
    // Predicated region
    $region26: #{gated_self_attention_dense.1} parent=1 // pred_check
      _
    $region27: #{gated_self_attention_dense.1} parent=1 // pred_check_branch
      %30 = sbr.rel (0) target = $region29
    $region28: #{gated_self_attention_dense.1} parent=1 // pred_region
      _
    $region29: #{gated_self_attention_dense.1} parent=1 // pred_fallthru
      _
    // Predicated region
    $region30: #{gated_self_attention_dense.1} parent=1 // pred_check
      _
    $region31: #{gated_self_attention_dense.1} parent=1 // pred_check_branch
      %32 = sbr.rel (0) target = $region33
    $region32: #{gated_self_attention_dense.1} parent=1 // pred_region
      _
    $region33: #{gated_self_attention_dense.1} parent=1 // pred_fallthru
      _
    // Predicated region
    $region34: #{gated_self_attention_dense.1} parent=1 // pred_check
      _
    $region35: #{gated_self_attention_dense.1} parent=1 // pred_check_branch
      %34 = sbr.rel (0) target = $region37
    $region36: #{gated_self_attention_dense.1} parent=1 // pred_region
      _
    $region37: #{gated_self_attention_dense.1} parent=1 // pred_fallthru
      _
    // Predicated region
    $region38: #{gated_self_attention_dense.1} parent=1 // pred_check
      _
    $region39: #{gated_self_attention_dense.1} parent=1 // pred_check_branch
      %36 = sbr.rel (0) target = $region41
    $region40: #{gated_self_attention_dense.1} parent=1 // pred_region
      %s38 = ssub.s32 16, 16
      %39 = vsyncadd [#allocation4], %s38
      %s41 = sshll.u32 %s9, 4
      %s42 = int_to_ptr.vmem [resolvable:$true] %s41
      %44 = dma.vmem_to_smem %s42, 16, [#allocation2], [#allocation4]
    $region41: #{gated_self_attention_dense.1} parent=1 // pred_fallthru
      _
    // Predicated region
    $region42: #{gated_self_attention_dense.1} parent=1 // pred_check
      _
    $region43: #{gated_self_attention_dense.1} parent=1 // pred_check_branch
      %46 = sbr.rel (0) target = $region45
    $region44: #{gated_self_attention_dense.1} parent=1 // pred_region
      %47 = dma.done [#allocation4], 16
    $region45: #{gated_self_attention_dense.1} parent=1 // pred_fallthru
      _
    %48 = sfence
    %v50 = vld [vmem:[%s7] sm:$0xff]
    %v51 = vld [vmem:[%s0] sm:$0xff]
    %v52 = vld [vmem:[%s0 + $0x8] sm:$0xff]
    %v53 = vld [vmem:[%s0 + $0x10] sm:$0xff]
    %v54 = vld [vmem:[%s0 + $0x18] sm:$0xff]
    %v55 = vld [vmem:[%s1] sm:$0xff]
    %v56 = vld [vmem:[%s1 + $0x8] sm:$0xff]
    %v57 = vpack.c.bf16 %v56, %v55
    %v58 = vld [vmem:[%s2] sm:$0xf]
    %v59 = vld [vmem:[%s2 + $0x4] sm:$0xf]
    %v60 = vlaneseq
    %v61 = vshrl.u32 %v60, 7
    %v62 = vsub.s32 0, %v61
    %v63 = vrot.slane %v50, %v62
    %v66 = vunpack.c.l.b16 %v58
    %v67 = vunpack.c.l.b16 %v59
    %v68 = vpack.c.b16 %v67, %v66
    %vm70 = vcmask 130048
    %v72 = vsel %vm70, %v57, 0
    %74 = vmatprep.subr.bf16.mxu0 0
    %75 = vmatpush1.bf16.msra.mxu0 0
    %76 = vmatprep.subr.bf16.mxu0 0
    %77 = vmatpush1.bf16.msra.mxu0 0
    %78 = vmatprep.subr.bf16.mxu0 0
    %79 = vmatpush1.bf16.msra.mxu0 0
    %80 = vmatprep.subr.bf16.mxu0 0
    %81 = vmatpush1.bf16.msra.mxu0 0
    %82 = vmatprep.subr.bf16.mxu0 0
    %83 = vmatpush1.bf16.msra.mxu0 0
    %84 = vmatprep.subr.bf16.mxu0 0
    %85 = vmatpush1.bf16.msra.mxu0 0
    %86 = vmatprep.subr.bf16.mxu0 0
    %87 = vmatpush1.bf16.msra.mxu0 0
    %88 = vmatprep.subr.bf16.mxu0 0
    %89 = vmatpush1.bf16.msra.mxu0 %v68
    %90 = vmatprep.subr.bf16.mxu0 0
    %91 = vmatpush2.bf16.msra.mxu0 0
    %92 = vmatprep.subr.bf16.mxu0 0
    %93 = vmatpush2.bf16.msra.mxu0 0
    %94 = vmatprep.subr.bf16.mxu0 0
    %95 = vmatpush2.bf16.msra.mxu0 0
    %96 = vmatprep.subr.bf16.mxu0 0
    %97 = vmatpush2.bf16.msra.mxu0 0
    %98 = vmatprep.subr.bf16.mxu0 0
    %99 = vmatpush2.bf16.msra.mxu0 0
    %100 = vmatprep.subr.bf16.mxu0 0
    %101 = vmatpush2.bf16.msra.mxu0 0
    %102 = vmatprep.subr.bf16.mxu0 0
    %103 = vmatpush2.bf16.msra.mxu0 0
    %104 = vmatprep.subr.bf16.mxu0 0
    %105 = vmatpush2.bf16.msra.mxu0 0
    %106 = vmatprep.mubr.bf16.mxu0 0
    %107 = vmatmul.mubr.bf16.gmra.mxu0 %v72
    %v108 = vpop.f32.mrf.mxu0
    %v109 = vadd.f32 %v63, %v108
    %v110 = vpop.f32.mrf.mxu0
    %v111 = vpop.f32.mrf.mxu0
    %v112 = vadd.f32 %v63, %v111
    %v113 = vpop.f32.mrf.mxu0
    %114 = vdwg.mxu0
    %vm115 = vcmask 261120
    %v116 = vsel %vm115, %v51, 0.0
    %117 = vadd.xlane.f32.xlu0 %v116
    %v118 = vpop.xlane.xlu0 %117
    %v119 = vsel %vm115, %v52, 0.0
    %120 = vadd.xlane.f32.xlu0 %v119
    %v121 = vpop.xlane.xlu0 %120
    %v122 = vsel %vm115, %v109, 0.0
    %123 = vadd.xlane.f32.xlu0 %v122
    %v124 = vpop.xlane.xlu0 %123
    %v125 = vsel %vm115, %v53, 0.0
    %126 = vadd.xlane.f32.xlu0 %v125
    %v127 = vpop.xlane.xlu0 %126
    %v128 = vsel %vm115, %v54, 0.0
    %129 = vadd.xlane.f32.xlu0 %v128
    %v130 = vpop.xlane.xlu0 %129
    %v131 = vsel %vm115, %v112, 0.0
    %132 = vadd.xlane.f32.xlu0 %v131
    %v133 = vpop.xlane.xlu0 %132
    %v134 = vrcp.pop 32.0
    %v135 = vmul.f32 %v118, %v134
    %v136 = vmul.f32 %v121, %v134
    %v137 = vmul.f32 %v124, %v134
    %v138 = vmul.f32 %v127, %v134
    %v139 = vmul.f32 %v130, %v134
    %v140 = vmul.f32 %v133, %v134
    %v141 = vsub.f32 %v51, %v135
    %v142 = vsub.f32 %v52, %v136
    %v143 = vsub.f32 %v109, %v137
    %v144 = vsub.f32 %v53, %v138
    %v145 = vsub.f32 %v54, %v139
    %v146 = vsub.f32 %v112, %v140
    %v147 = vmul.f32 %v141, %v141
    %v148 = vmul.f32 %v142, %v142
    %v149 = vmul.f32 %v143, %v143
    %v150 = vmul.f32 %v144, %v144
    %v151 = vmul.f32 %v145, %v145
    %v152 = vmul.f32 %v146, %v146
    %v153 = vsel %vm115, %v147, 0.0
    %154 = vadd.xlane.f32.xlu0 %v153
    %v155 = vpop.xlane.xlu0 %154
    %v156 = vsel %vm115, %v148, 0.0
    %157 = vadd.xlane.f32.xlu0 %v156
    %v158 = vpop.xlane.xlu0 %157
    %v159 = vsel %vm115, %v149, 0.0
    %160 = vadd.xlane.f32.xlu0 %v159
    %v161 = vpop.xlane.xlu0 %160
    %v162 = vsel %vm115, %v150, 0.0
    %163 = vadd.xlane.f32.xlu0 %v162
    %v164 = vpop.xlane.xlu0 %163
    %v165 = vsel %vm115, %v151, 0.0
    %166 = vadd.xlane.f32.xlu0 %v165
    %v167 = vpop.xlane.xlu0 %166
    %v168 = vsel %vm115, %v152, 0.0
    %169 = vadd.xlane.f32.xlu0 %v168
    %v170 = vpop.xlane.xlu0 %169
    %v171 = vmul.f32 %v155, %v134
    %v172 = vmul.f32 %v158, %v134
    %v173 = vmul.f32 %v161, %v134
    %v174 = vmul.f32 %v164, %v134
    %v175 = vmul.f32 %v167, %v134
    %v176 = vmul.f32 %v170, %v134
    %v177 = vadd.f32 %v171, 1e-05
    %v178 = vadd.f32 %v172, 1e-05
    %v179 = vadd.f32 %v173, 1e-05
    %v180 = vadd.f32 %v174, 1e-05
    %v181 = vadd.f32 %v175, 1e-05
    %v182 = vadd.f32 %v176, 1e-05
    %v183 = vrsqrt.pop %v177
    %v184 = vrsqrt.pop %v178
    %v185 = vrsqrt.pop %v179
    %v186 = vrsqrt.pop %v180
    %v187 = vrsqrt.pop %v181
    %v188 = vrsqrt.pop %v182
    %v189 = vmul.f32 %v141, %v183
    %v190 = vmul.f32 %v142, %v184
    %v191 = vmul.f32 %v143, %v185
    %v192 = vmul.f32 %v144, %v186
    %v193 = vmul.f32 %v145, %v187
    %v194 = vmul.f32 %v146, %v188
    %v195 = vlaneseq
    %v196 = vshrl.u32 %v195, 7
    %v197 = vsub.s32 2, %v196
    %v198 = vrot.slane %v50, %v197
    %v199 = vmul.f32 %v189, %v198
    %v200 = vmul.f32 %v190, %v198
    %v201 = vmul.f32 %v191, %v198
    %v202 = vmul.f32 %v192, %v198
    %v203 = vmul.f32 %v193, %v198
    %v204 = vmul.f32 %v194, %v198
    %v205 = vlaneseq
    %v206 = vshrl.u32 %v205, 7
    %v207 = vsub.s32 3, %v206
    %v208 = vrot.slane %v50, %v207
    %v209 = vadd.f32 %v199, %v208
    %v210 = vadd.f32 %v200, %v208
    %v211 = vadd.f32 %v201, %v208
    %v212 = vadd.f32 %v202, %v208
    %v213 = vadd.f32 %v203, %v208
    %v214 = vadd.f32 %v204, %v208
    %v215 = vpack.c.bf16 %v210, %v209
    %v216 = vpack.c.bf16 %v212, %v211
    %v217 = vpack.c.bf16 %v214, %v213
    %v218 = vld [vmem:[%s3] sm:$0xf]
    %v219 = vld [vmem:[%s3 + $0x4] sm:$0xf]
    %v220 = vld [vmem:[%s3 + $0x8] sm:$0xf]
    %v221 = vld [vmem:[%s3 + $0xc] sm:$0xf]
    %v226 = vunpack.c.l.b16 %v218
    %v227 = vunpack.c.l.b16 %v219
    %v228 = vunpack.c.l.b16 %v220
    %v229 = vunpack.c.l.b16 %v221
    %v230 = vpack.c.b16 %v227, %v226
    %v231 = vpack.c.b16 %v229, %v228
    %v235 = vsel %vm115, %v215, 0
    %v238 = vsel %vm115, %v216, 0
    %v241 = vsel %vm115, %v217, 0
    %243 = vmatprep.subr.bf16.mxu0 0
    %244 = vmatpush1.bf16.msra.mxu0 0
    %245 = vmatprep.subr.bf16.mxu0 0
    %246 = vmatpush1.bf16.msra.mxu0 0
    %247 = vmatprep.subr.bf16.mxu0 0
    %248 = vmatpush1.bf16.msra.mxu0 0
    %249 = vmatprep.subr.bf16.mxu0 0
    %250 = vmatpush1.bf16.msra.mxu0 0
    %251 = vmatprep.subr.bf16.mxu0 0
    %252 = vmatpush1.bf16.msra.mxu0 0
    %253 = vmatprep.subr.bf16.mxu0 0
    %254 = vmatpush1.bf16.msra.mxu0 0
    %255 = vmatprep.subr.bf16.mxu0 0
    %256 = vmatpush1.bf16.msra.mxu0 %v231
    %257 = vmatprep.subr.bf16.mxu0 0
    %258 = vmatpush1.bf16.msra.mxu0 %v230
    %259 = vmatprep.subr.bf16.mxu0 0
    %260 = vmatpush2.bf16.msra.mxu0 0
    %261 = vmatprep.subr.bf16.mxu0 0
    %262 = vmatpush2.bf16.msra.mxu0 0
    %263 = vmatprep.subr.bf16.mxu0 0
    %264 = vmatpush2.bf16.msra.mxu0 0
    %265 = vmatprep.subr.bf16.mxu0 0
    %266 = vmatpush2.bf16.msra.mxu0 0
    %267 = vmatprep.subr.bf16.mxu0 0
    %268 = vmatpush2.bf16.msra.mxu0 0
    %269 = vmatprep.subr.bf16.mxu0 0
    %270 = vmatpush2.bf16.msra.mxu0 0
    %271 = vmatprep.subr.bf16.mxu0 0
    %272 = vmatpush2.bf16.msra.mxu0 0
    %273 = vmatprep.subr.bf16.mxu0 0
    %274 = vmatpush2.bf16.msra.mxu0 0
    %275 = vmatprep.mubr.bf16.mxu0 0
    %276 = vmatmul.mubr.bf16.gmra.mxu0 %v235
    %v277 = vpop.f32.mrf.mxu0
    %v278 = vadd.f32 0.0, %v277
    %v279 = vpop.f32.mrf.mxu0
    %v280 = vpop.f32.mrf.mxu0
    %v281 = vadd.f32 0.0, %v280
    %v282 = vpop.f32.mrf.mxu0
    %283 = vmatprep.mubr.bf16.mxu0 0
    %284 = vmatmul.mubr.bf16.gmra.mxu0 %v238
    %v285 = vpop.f32.mrf.mxu0
    %v286 = vadd.f32 0.0, %v285
    %v287 = vpop.f32.mrf.mxu0
    %v288 = vpop.f32.mrf.mxu0
    %v289 = vadd.f32 0.0, %v288
    %v290 = vpop.f32.mrf.mxu0
    %291 = vmatprep.mubr.bf16.mxu0 0
    %292 = vmatmul.mubr.bf16.gmra.mxu0 %v241
    %v293 = vpop.f32.mrf.mxu0
    %v294 = vadd.f32 0.0, %v293
    %v295 = vpop.f32.mrf.mxu0
    %v296 = vpop.f32.mrf.mxu0
    %v297 = vadd.f32 0.0, %v296
    %v298 = vpop.f32.mrf.mxu0
    %299 = vdwg.mxu0
    %v300 = vpack.c.bf16 %v281, %v278
    %v301 = vpack.c.bf16 %v289, %v286
    %v302 = vpack.c.bf16 %v297, %v294
    %305 = vrot.lane.b32.xlu0 %v300, 96
    %v306 = vpop.permute.xlu0 %305
    %307 = vrot.lane.b32.xlu0 %v301, 96
    %v308 = vpop.permute.xlu0 %307
    %v310 = vsel %vm70, %v300, 0
    %v313 = vsel %vm70, %v301, 0
    %v316 = vsel %vm70, %v306, 0
    %v319 = vsel %vm70, %v308, 0
    %321 = vmatprep.subr.bf16.mxu0 0
    %322 = vmatpush1.bf16.xpose.msra.mxu0 0
    %323 = vmatprep.subr.bf16.mxu0 0
    %324 = vmatpush1.bf16.xpose.msra.mxu0 0
    %325 = vmatprep.subr.bf16.mxu0 0
    %326 = vmatpush1.bf16.xpose.msra.mxu0 0
    %327 = vmatprep.subr.bf16.mxu0 0
    %328 = vmatpush1.bf16.xpose.msra.mxu0 0
    %329 = vmatprep.subr.bf16.mxu0 0
    %330 = vmatpush1.bf16.xpose.msra.mxu0 0
    %331 = vmatprep.subr.bf16.mxu0 0
    %332 = vmatpush1.bf16.xpose.msra.mxu0 0
    %333 = vmatprep.subr.bf16.mxu0 0
    %334 = vmatpush1.bf16.xpose.msra.mxu0 %v319
    %335 = vmatprep.subr.bf16.mxu0 0
    %336 = vmatpush1.bf16.xpose.msra.mxu0 %v316
    %337 = vmatprep.subr.bf16.mxu0 0
    %338 = vmatpush2.bf16.xpose.msra.mxu0 0
    %339 = vmatprep.subr.bf16.mxu0 0
    %340 = vmatpush2.bf16.xpose.msra.mxu0 0
    %341 = vmatprep.subr.bf16.mxu0 0
    %342 = vmatpush2.bf16.xpose.msra.mxu0 0
    %343 = vmatprep.subr.bf16.mxu0 0
    %344 = vmatpush2.bf16.xpose.msra.mxu0 0
    %345 = vmatprep.subr.bf16.mxu0 0
    %346 = vmatpush2.bf16.xpose.msra.mxu0 0
    %347 = vmatprep.subr.bf16.mxu0 0
    %348 = vmatpush2.bf16.xpose.msra.mxu0 0
    %349 = vmatprep.subr.bf16.mxu0 0
    %350 = vmatpush2.bf16.xpose.msra.mxu0 0
    %351 = vmatprep.subr.bf16.mxu0 0
    %352 = vmatpush2.bf16.xpose.msra.mxu0 0
    %353 = vmatprep.mubr.bf16.mxu0 0
    %354 = vmatmul.mubr.bf16.gmra.mxu0 %v310
    %v355 = vpop.f32.mrf.mxu0
    %v356 = vadd.f32 0.0, %v355
    %v357 = vpop.f32.mrf.mxu0
    %v358 = vpop.f32.mrf.mxu0
    %v359 = vadd.f32 0.0, %v358
    %v360 = vpop.f32.mrf.mxu0
    %361 = vmatprep.mubr.bf16.mxu0 0
    %362 = vmatmul.mubr.bf16.gmra.mxu0 %v313
    %v363 = vpop.f32.mrf.mxu0
    %v364 = vadd.f32 0.0, %v363
    %v365 = vpop.f32.mrf.mxu0
    %v366 = vpop.f32.mrf.mxu0
    %v367 = vpop.f32.mrf.mxu0
    %368 = vdwg.mxu0
    %vm369 = vcmask 195584
    %v370 = vsel %vm369, %v356, -inf
    %371 = vmax.xlane.f32.xlu0 %v370
    %v372 = vpop.xlane.xlu0 %371
    %v373 = vsel %vm369, %v359, -inf
    %374 = vmax.xlane.f32.xlu0 %v373
    %v375 = vpop.xlane.xlu0 %374
    %v376 = vsel %vm369, %v364, -inf
    %377 = vmax.xlane.f32.xlu0 %v376
    %v378 = vpop.xlane.xlu0 %377
    %v379 = vsub.f32 %v356, %v372
    %v380 = vsub.f32 %v359, %v375
    %v381 = vsub.f32 %v364, %v378
    %v382 = vmul.f32 %v379, 1.442695
    %v383 = vpow.pop %v382
    %v384 = vmul.f32 %v380, 1.442695
    %v385 = vpow.pop %v384
    %v386 = vmul.f32 %v381, 1.442695
    %v387 = vpow.pop %v386
    %v388 = vsel %vm369, %v383, 0.0
    %389 = vadd.xlane.f32.xlu0 %v388
    %v390 = vpop.xlane.xlu0 %389
    %v391 = vsel %vm369, %v385, 0.0
    %392 = vadd.xlane.f32.xlu0 %v391
    %v393 = vpop.xlane.xlu0 %392
    %v394 = vsel %vm369, %v387, 0.0
    %395 = vadd.xlane.f32.xlu0 %v394
    %v396 = vpop.xlane.xlu0 %395
    %v397 = vrcp.pop %v390
    %v398 = vrcp.pop %v393
    %v399 = vrcp.pop %v396
    %v400 = vmul.f32 %v383, %v397
    %v401 = vmul.f32 %v385, %v398
    %v402 = vmul.f32 %v387, %v399
    %v403 = vpack.c.bf16 %v401, %v400
    %v404 = vpack.c.bf16 %v402, %v402
    %405 = vrot.lane.b32.xlu0 %v300, 64
    %v406 = vpop.permute.xlu0 %405
    %407 = vrot.lane.b32.xlu0 %v301, 64
    %v408 = vpop.permute.xlu0 %407
    %v411 = vsel %vm369, %v403, 0
    %v414 = vsel %vm369, %v404, 0
    %vm416 = vcmask 1043456
    %v418 = vsel %vm416, %v408, 0
    %420 = vmatprep.subr.bf16.mxu0 0
    %421 = vmatpush1.bf16.msra.mxu0 0
    %422 = vmatprep.subr.bf16.mxu0 0
    %423 = vmatpush1.bf16.msra.mxu0 0
    %424 = vmatprep.subr.bf16.mxu0 0
    %425 = vmatpush1.bf16.msra.mxu0 0
    %426 = vmatprep.subr.bf16.mxu0 0
    %427 = vmatpush1.bf16.msra.mxu0 0
    %428 = vmatprep.subr.bf16.mxu0 0
    %429 = vmatpush1.bf16.msra.mxu0 0
    %430 = vmatprep.subr.bf16.mxu0 0
    %431 = vmatpush1.bf16.msra.mxu0 0
    %432 = vmatprep.subr.bf16.mxu0 0
    %433 = vmatpush1.bf16.msra.mxu0 %v418
    %434 = vmatprep.subr.bf16.mxu0 0
    %435 = vmatpush1.bf16.msra.mxu0 %v406
    %436 = vmatprep.subr.bf16.mxu0 0
    %437 = vmatpush2.bf16.msra.mxu0 0
    %438 = vmatprep.subr.bf16.mxu0 0
    %439 = vmatpush2.bf16.msra.mxu0 0
    %440 = vmatprep.subr.bf16.mxu0 0
    %441 = vmatpush2.bf16.msra.mxu0 0
    %442 = vmatprep.subr.bf16.mxu0 0
    %443 = vmatpush2.bf16.msra.mxu0 0
    %444 = vmatprep.subr.bf16.mxu0 0
    %445 = vmatpush2.bf16.msra.mxu0 0
    %446 = vmatprep.subr.bf16.mxu0 0
    %447 = vmatpush2.bf16.msra.mxu0 0
    %448 = vmatprep.subr.bf16.mxu0 0
    %449 = vmatpush2.bf16.msra.mxu0 0
    %450 = vmatprep.subr.bf16.mxu0 0
    %451 = vmatpush2.bf16.msra.mxu0 0
    %452 = vmatprep.mubr.bf16.mxu0 0
    %453 = vmatmul.mubr.bf16.gmra.mxu0 %v411
    %v454 = vpop.f32.mrf.mxu0
    %v455 = vadd.f32 0.0, %v454
    %v456 = vpop.f32.mrf.mxu0
    %v457 = vpop.f32.mrf.mxu0
    %v458 = vadd.f32 0.0, %v457
    %v459 = vpop.f32.mrf.mxu0
    %460 = vmatprep.mubr.bf16.mxu0 0
    %461 = vmatmul.mubr.bf16.gmra.mxu0 %v414
    %v462 = vpop.f32.mrf.mxu0
    %v463 = vadd.f32 0.0, %v462
    %v464 = vpop.f32.mrf.mxu0
    %v465 = vpop.f32.mrf.mxu0
    %v466 = vpop.f32.mrf.mxu0
    %467 = vdwg.mxu0
    %468 = vrot.lane.b32.xlu0 %v300, 112
    %v469 = vpop.permute.xlu0 %468
    %470 = vrot.lane.b32.xlu0 %v301, 112
    %v471 = vpop.permute.xlu0 %470
    %472 = vrot.lane.b32.xlu0 %v300, 80
    %v473 = vpop.permute.xlu0 %472
    %474 = vrot.lane.b32.xlu0 %v301, 80
    %v475 = vpop.permute.xlu0 %474
    %v477 = vsel %vm70, %v469, 0
    %v480 = vsel %vm70, %v471, 0
    %v483 = vsel %vm70, %v473, 0
    %v486 = vsel %vm70, %v475, 0
    %488 = vmatprep.subr.bf16.mxu0 0
    %489 = vmatpush1.bf16.xpose.msra.mxu0 0
    %490 = vmatprep.subr.bf16.mxu0 0
    %491 = vmatpush1.bf16.xpose.msra.mxu0 0
    %492 = vmatprep.subr.bf16.mxu0 0
    %493 = vmatpush1.bf16.xpose.msra.mxu0 0
    %494 = vmatprep.subr.bf16.mxu0 0
    %495 = vmatpush1.bf16.xpose.msra.mxu0 0
    %496 = vmatprep.subr.bf16.mxu0 0
    %497 = vmatpush1.bf16.xpose.msra.mxu0 0
    %498 = vmatprep.subr.bf16.mxu0 0
    %499 = vmatpush1.bf16.xpose.msra.mxu0 0
    %500 = vmatprep.subr.bf16.mxu0 0
    %501 = vmatpush1.bf16.xpose.msra.mxu0 %v486
    %502 = vmatprep.subr.bf16.mxu0 0
    %503 = vmatpush1.bf16.xpose.msra.mxu0 %v483
    %504 = vmatprep.subr.bf16.mxu0 0
    %505 = vmatpush2.bf16.xpose.msra.mxu0 0
    %506 = vmatprep.subr.bf16.mxu0 0
    %507 = vmatpush2.bf16.xpose.msra.mxu0 0
    %508 = vmatprep.subr.bf16.mxu0 0
    %509 = vmatpush2.bf16.xpose.msra.mxu0 0
    %510 = vmatprep.subr.bf16.mxu0 0
    %511 = vmatpush2.bf16.xpose.msra.mxu0 0
    %512 = vmatprep.subr.bf16.mxu0 0
    %513 = vmatpush2.bf16.xpose.msra.mxu0 0
    %514 = vmatprep.subr.bf16.mxu0 0
    %515 = vmatpush2.bf16.xpose.msra.mxu0 0
    %516 = vmatprep.subr.bf16.mxu0 0
    %517 = vmatpush2.bf16.xpose.msra.mxu0 0
    %518 = vmatprep.subr.bf16.mxu0 0
    %519 = vmatpush2.bf16.xpose.msra.mxu0 0
    %520 = vmatprep.mubr.bf16.mxu0 0
    %521 = vmatmul.mubr.bf16.gmra.mxu0 %v477
    %v522 = vpop.f32.mrf.mxu0
    %v523 = vadd.f32 0.0, %v522
    %v524 = vpop.f32.mrf.mxu0
    %v525 = vpop.f32.mrf.mxu0
    %v526 = vadd.f32 0.0, %v525
    %v527 = vpop.f32.mrf.mxu0
    %528 = vmatprep.mubr.bf16.mxu0 0
    %529 = vmatmul.mubr.bf16.gmra.mxu0 %v480
    %v530 = vpop.f32.mrf.mxu0
    %v531 = vadd.f32 0.0, %v530
    %v532 = vpop.f32.mrf.mxu0
    %v533 = vpop.f32.mrf.mxu0
    %v534 = vpop.f32.mrf.mxu0
    %535 = vdwg.mxu0
    %v536 = vsel %vm369, %v523, -inf
    %537 = vmax.xlane.f32.xlu0 %v536
    %v538 = vpop.xlane.xlu0 %537
    %v539 = vsel %vm369, %v526, -inf
    %540 = vmax.xlane.f32.xlu0 %v539
    %v541 = vpop.xlane.xlu0 %540
    %v542 = vsel %vm369, %v531, -inf
    %543 = vmax.xlane.f32.xlu0 %v542
    %v544 = vpop.xlane.xlu0 %543
    %v545 = vsub.f32 %v523, %v538
    %v546 = vsub.f32 %v526, %v541
    %v547 = vsub.f32 %v531, %v544
    %v548 = vmul.f32 %v545, 1.442695
    %v549 = vpow.pop %v548
    %v550 = vmul.f32 %v546, 1.442695
    %v551 = vpow.pop %v550
    %v552 = vmul.f32 %v547, 1.442695
    %v553 = vpow.pop %v552
    %v554 = vsel %vm369, %v549, 0.0
    %555 = vadd.xlane.f32.xlu0 %v554
    %v556 = vpop.xlane.xlu0 %555
    %v557 = vsel %vm369, %v551, 0.0
    %558 = vadd.xlane.f32.xlu0 %v557
    %v559 = vpop.xlane.xlu0 %558
    %v560 = vsel %vm369, %v553, 0.0
    %561 = vadd.xlane.f32.xlu0 %v560
    %v562 = vpop.xlane.xlu0 %561
    %v563 = vrcp.pop %v556
    %v564 = vrcp.pop %v559
    %v565 = vrcp.pop %v562
    %v566 = vmul.f32 %v549, %v563
    %v567 = vmul.f32 %v551, %v564
    %v568 = vmul.f32 %v553, %v565
    %v569 = vpack.c.bf16 %v567, %v566
    %v570 = vpack.c.bf16 %v568, %v568
    %571 = vrot.lane.b32.xlu0 %v300, 48
    %v572 = vpop.permute.xlu0 %571
    %573 = vrot.lane.b32.xlu0 %v301, 48
    %v574 = vpop.permute.xlu0 %573
    %v577 = vsel %vm369, %v569, 0
    %v580 = vsel %vm369, %v570, 0
    %v583 = vsel %vm416, %v574, 0
    %585 = vmatprep.subr.bf16.mxu0 0
    %586 = vmatpush1.bf16.msra.mxu0 0
    %587 = vmatprep.subr.bf16.mxu0 0
    %588 = vmatpush1.bf16.msra.mxu0 0
    %589 = vmatprep.subr.bf16.mxu0 0
    %590 = vmatpush1.bf16.msra.mxu0 0
    %591 = vmatprep.subr.bf16.mxu0 0
    %592 = vmatpush1.bf16.msra.mxu0 0
    %593 = vmatprep.subr.bf16.mxu0 0
    %594 = vmatpush1.bf16.msra.mxu0 0
    %595 = vmatprep.subr.bf16.mxu0 0
    %596 = vmatpush1.bf16.msra.mxu0 0
    %597 = vmatprep.subr.bf16.mxu0 0
    %598 = vmatpush1.bf16.msra.mxu0 %v583
    %599 = vmatprep.subr.bf16.mxu0 0
    %600 = vmatpush1.bf16.msra.mxu0 %v572
    %601 = vmatprep.subr.bf16.mxu0 0
    %602 = vmatpush2.bf16.msra.mxu0 0
    %603 = vmatprep.subr.bf16.mxu0 0
    %604 = vmatpush2.bf16.msra.mxu0 0
    %605 = vmatprep.subr.bf16.mxu0 0
    %606 = vmatpush2.bf16.msra.mxu0 0
    %607 = vmatprep.subr.bf16.mxu0 0
    %608 = vmatpush2.bf16.msra.mxu0 0
    %609 = vmatprep.subr.bf16.mxu0 0
    %610 = vmatpush2.bf16.msra.mxu0 0
    %611 = vmatprep.subr.bf16.mxu0 0
    %612 = vmatpush2.bf16.msra.mxu0 0
    %613 = vmatprep.subr.bf16.mxu0 0
    %614 = vmatpush2.bf16.msra.mxu0 0
    %615 = vmatprep.subr.bf16.mxu0 0
    %616 = vmatpush2.bf16.msra.mxu0 0
    %617 = vmatprep.mubr.bf16.mxu0 0
    %618 = vmatmul.mubr.bf16.gmra.mxu0 %v577
    %v619 = vpop.f32.mrf.mxu0
    %v620 = vadd.f32 0.0, %v619
    %v621 = vpop.f32.mrf.mxu0
    %v622 = vpop.f32.mrf.mxu0
    %v623 = vadd.f32 0.0, %v622
    %v624 = vpop.f32.mrf.mxu0
    %625 = vmatprep.mubr.bf16.mxu0 0
    %626 = vmatmul.mubr.bf16.gmra.mxu0 %v580
    %v627 = vpop.f32.mrf.mxu0
    %v628 = vadd.f32 0.0, %v627
    %v629 = vpop.f32.mrf.mxu0
    %v630 = vpop.f32.mrf.mxu0
    %v631 = vpop.f32.mrf.mxu0
    %632 = vdwg.mxu0
    %636 = vrot.lane.b32.xlu0 %v620, 16
    %v637 = vpop.permute.xlu0 %636
    %638 = vrot.lane.b32.xlu0 %v623, 16
    %v639 = vpop.permute.xlu0 %638
    %640 = vrot.lane.b32.xlu0 %v628, 16
    %v641 = vpop.permute.xlu0 %640
    %v645 = vsel %vm70, %v455, %v637
    %v646 = vsel %vm70, %v458, %v639
    %v647 = vsel %vm70, %v463, %v641
    %vm649 = vcmask 1043456
    %v650 = vrot.slane %v301, 4
    %v651 = vrot.slane %v302, 4
    %v652 = vsel %vm649, %v650, %v651
    %653 = vrot.lane.b32.xlu0 %v652, 96
    %v654 = vpop.permute.xlu0 %653
    %655 = vrot.lane.b32.xlu0 %v651, 96
    %v656 = vpop.permute.xlu0 %655
    %v658 = vsel %vm70, %v652, 0
    %v661 = vsel %vm70, %v651, 0
    %v664 = vsel %vm70, %v654, 0
    %v667 = vsel %vm70, %v656, 0
    %669 = vmatprep.subr.bf16.mxu0 0
    %670 = vmatpush1.bf16.xpose.msra.mxu0 0
    %671 = vmatprep.subr.bf16.mxu0 0
    %672 = vmatpush1.bf16.xpose.msra.mxu0 0
    %673 = vmatprep.subr.bf16.mxu0 0
    %674 = vmatpush1.bf16.xpose.msra.mxu0 0
    %675 = vmatprep.subr.bf16.mxu0 0
    %676 = vmatpush1.bf16.xpose.msra.mxu0 0
    %677 = vmatprep.subr.bf16.mxu0 0
    %678 = vmatpush1.bf16.xpose.msra.mxu0 0
    %679 = vmatprep.subr.bf16.mxu0 0
    %680 = vmatpush1.bf16.xpose.msra.mxu0 0
    %681 = vmatprep.subr.bf16.mxu0 0
    %682 = vmatpush1.bf16.xpose.msra.mxu0 %v667
    %683 = vmatprep.subr.bf16.mxu0 0
    %684 = vmatpush1.bf16.xpose.msra.mxu0 %v664
    %685 = vmatprep.subr.bf16.mxu0 0
    %686 = vmatpush2.bf16.xpose.msra.mxu0 0
    %687 = vmatprep.subr.bf16.mxu0 0
    %688 = vmatpush2.bf16.xpose.msra.mxu0 0
    %689 = vmatprep.subr.bf16.mxu0 0
    %690 = vmatpush2.bf16.xpose.msra.mxu0 0
    %691 = vmatprep.subr.bf16.mxu0 0
    %692 = vmatpush2.bf16.xpose.msra.mxu0 0
    %693 = vmatprep.subr.bf16.mxu0 0
    %694 = vmatpush2.bf16.xpose.msra.mxu0 0
    %695 = vmatprep.subr.bf16.mxu0 0
    %696 = vmatpush2.bf16.xpose.msra.mxu0 0
    %697 = vmatprep.subr.bf16.mxu0 0
    %698 = vmatpush2.bf16.xpose.msra.mxu0 0
    %699 = vmatprep.subr.bf16.mxu0 0
    %700 = vmatpush2.bf16.xpose.msra.mxu0 0
    %701 = vmatprep.mubr.bf16.mxu0 0
    %702 = vmatmul.mubr.bf16.gmra.mxu0 %v658
    %v703 = vpop.f32.mrf.mxu0
    %v704 = vadd.f32 0.0, %v703
    %v705 = vpop.f32.mrf.mxu0
    %v706 = vpop.f32.mrf.mxu0
    %v707 = vadd.f32 0.0, %v706
    %v708 = vpop.f32.mrf.mxu0
    %709 = vmatprep.mubr.bf16.mxu0 0
    %710 = vmatmul.mubr.bf16.gmra.mxu0 %v661
    %v711 = vpop.f32.mrf.mxu0
    %v712 = vadd.f32 0.0, %v711
    %v713 = vpop.f32.mrf.mxu0
    %v714 = vpop.f32.mrf.mxu0
    %v715 = vpop.f32.mrf.mxu0
    %716 = vdwg.mxu0
    %v717 = vsel %vm369, %v704, -inf
    %718 = vmax.xlane.f32.xlu0 %v717
    %v719 = vpop.xlane.xlu0 %718
    %v720 = vsel %vm369, %v707, -inf
    %721 = vmax.xlane.f32.xlu0 %v720
    %v722 = vpop.xlane.xlu0 %721
    %v723 = vsel %vm369, %v712, -inf
    %724 = vmax.xlane.f32.xlu0 %v723
    %v725 = vpop.xlane.xlu0 %724
    %v726 = vsub.f32 %v704, %v719
    %v727 = vsub.f32 %v707, %v722
    %v728 = vsub.f32 %v712, %v725
    %v729 = vmul.f32 %v726, 1.442695
    %v730 = vpow.pop %v729
    %v731 = vmul.f32 %v727, 1.442695
    %v732 = vpow.pop %v731
    %v733 = vmul.f32 %v728, 1.442695
    %v734 = vpow.pop %v733
    %v735 = vsel %vm369, %v730, 0.0
    %736 = vadd.xlane.f32.xlu0 %v735
    %v737 = vpop.xlane.xlu0 %736
    %v738 = vsel %vm369, %v732, 0.0
    %739 = vadd.xlane.f32.xlu0 %v738
    %v740 = vpop.xlane.xlu0 %739
    %v741 = vsel %vm369, %v734, 0.0
    %742 = vadd.xlane.f32.xlu0 %v741
    %v743 = vpop.xlane.xlu0 %742
    %v744 = vrcp.pop %v737
    %v745 = vrcp.pop %v740
    %v746 = vrcp.pop %v743
    %v747 = vmul.f32 %v730, %v744
    %v748 = vmul.f32 %v732, %v745
    %v749 = vmul.f32 %v734, %v746
    %v750 = vpack.c.bf16 %v748, %v747
    %v751 = vpack.c.bf16 %v749, %v749
    %752 = vrot.lane.b32.xlu0 %v652, 64
    %v753 = vpop.permute.xlu0 %752
    %754 = vrot.lane.b32.xlu0 %v651, 64
    %v755 = vpop.permute.xlu0 %754
    %v758 = vsel %vm369, %v750, 0
    %v761 = vsel %vm369, %v751, 0
    %v764 = vsel %vm416, %v755, 0
    %766 = vmatprep.subr.bf16.mxu0 0
    %767 = vmatpush1.bf16.msra.mxu0 0
    %768 = vmatprep.subr.bf16.mxu0 0
    %769 = vmatpush1.bf16.msra.mxu0 0
    %770 = vmatprep.subr.bf16.mxu0 0
    %771 = vmatpush1.bf16.msra.mxu0 0
    %772 = vmatprep.subr.bf16.mxu0 0
    %773 = vmatpush1.bf16.msra.mxu0 0
    %774 = vmatprep.subr.bf16.mxu0 0
    %775 = vmatpush1.bf16.msra.mxu0 0
    %776 = vmatprep.subr.bf16.mxu0 0
    %777 = vmatpush1.bf16.msra.mxu0 0
    %778 = vmatprep.subr.bf16.mxu0 0
    %779 = vmatpush1.bf16.msra.mxu0 %v764
    %780 = vmatprep.subr.bf16.mxu0 0
    %781 = vmatpush1.bf16.msra.mxu0 %v753
    %782 = vmatprep.subr.bf16.mxu0 0
    %783 = vmatpush2.bf16.msra.mxu0 0
    %784 = vmatprep.subr.bf16.mxu0 0
    %785 = vmatpush2.bf16.msra.mxu0 0
    %786 = vmatprep.subr.bf16.mxu0 0
    %787 = vmatpush2.bf16.msra.mxu0 0
    %788 = vmatprep.subr.bf16.mxu0 0
    %789 = vmatpush2.bf16.msra.mxu0 0
    %790 = vmatprep.subr.bf16.mxu0 0
    %791 = vmatpush2.bf16.msra.mxu0 0
    %792 = vmatprep.subr.bf16.mxu0 0
    %793 = vmatpush2.bf16.msra.mxu0 0
    %794 = vmatprep.subr.bf16.mxu0 0
    %795 = vmatpush2.bf16.msra.mxu0 0
    %796 = vmatprep.subr.bf16.mxu0 0
    %797 = vmatpush2.bf16.msra.mxu0 0
    %798 = vmatprep.mubr.bf16.mxu0 0
    %799 = vmatmul.mubr.bf16.gmra.mxu0 %v758
    %v800 = vpop.f32.mrf.mxu0
    %v801 = vadd.f32 0.0, %v800
    %v802 = vpop.f32.mrf.mxu0
    %v803 = vpop.f32.mrf.mxu0
    %v804 = vadd.f32 0.0, %v803
    %v805 = vpop.f32.mrf.mxu0
    %806 = vmatprep.mubr.bf16.mxu0 0
    %807 = vmatmul.mubr.bf16.gmra.mxu0 %v761
    %v808 = vpop.f32.mrf.mxu0
    %v809 = vadd.f32 0.0, %v808
    %v810 = vpop.f32.mrf.mxu0
    %v811 = vpop.f32.mrf.mxu0
    %v812 = vpop.f32.mrf.mxu0
    %813 = vdwg.mxu0
    %814 = vrot.lane.b32.xlu0 %v652, 112
    %v815 = vpop.permute.xlu0 %814
    %816 = vrot.lane.b32.xlu0 %v651, 112
    %v817 = vpop.permute.xlu0 %816
    %818 = vrot.lane.b32.xlu0 %v652, 80
    %v819 = vpop.permute.xlu0 %818
    %820 = vrot.lane.b32.xlu0 %v651, 80
    %v821 = vpop.permute.xlu0 %820
    %v823 = vsel %vm70, %v815, 0
    %v826 = vsel %vm70, %v817, 0
    %v829 = vsel %vm70, %v819, 0
    %v832 = vsel %vm70, %v821, 0
    %834 = vmatprep.subr.bf16.mxu0 0
    %835 = vmatpush1.bf16.xpose.msra.mxu0 0
    %836 = vmatprep.subr.bf16.mxu0 0
    %837 = vmatpush1.bf16.xpose.msra.mxu0 0
    %838 = vmatprep.subr.bf16.mxu0 0
    %839 = vmatpush1.bf16.xpose.msra.mxu0 0
    %840 = vmatprep.subr.bf16.mxu0 0
    %841 = vmatpush1.bf16.xpose.msra.mxu0 0
    %842 = vmatprep.subr.bf16.mxu0 0
    %843 = vmatpush1.bf16.xpose.msra.mxu0 0
    %844 = vmatprep.subr.bf16.mxu0 0
    %845 = vmatpush1.bf16.xpose.msra.mxu0 0
    %846 = vmatprep.subr.bf16.mxu0 0
    %847 = vmatpush1.bf16.xpose.msra.mxu0 %v832
    %848 = vmatprep.subr.bf16.mxu0 0
    %849 = vmatpush1.bf16.xpose.msra.mxu0 %v829
    %850 = vmatprep.subr.bf16.mxu0 0
    %851 = vmatpush2.bf16.xpose.msra.mxu0 0
    %852 = vmatprep.subr.bf16.mxu0 0
    %853 = vmatpush2.bf16.xpose.msra.mxu0 0
    %854 = vmatprep.subr.bf16.mxu0 0
    %855 = vmatpush2.bf16.xpose.msra.mxu0 0
    %856 = vmatprep.subr.bf16.mxu0 0
    %857 = vmatpush2.bf16.xpose.msra.mxu0 0
    %858 = vmatprep.subr.bf16.mxu0 0
    %859 = vmatpush2.bf16.xpose.msra.mxu0 0
    %860 = vmatprep.subr.bf16.mxu0 0
    %861 = vmatpush2.bf16.xpose.msra.mxu0 0
    %862 = vmatprep.subr.bf16.mxu0 0
    %863 = vmatpush2.bf16.xpose.msra.mxu0 0
    %864 = vmatprep.subr.bf16.mxu0 0
    %865 = vmatpush2.bf16.xpose.msra.mxu0 0
    %866 = vmatprep.mubr.bf16.mxu0 0
    %867 = vmatmul.mubr.bf16.gmra.mxu0 %v823
    %v868 = vpop.f32.mrf.mxu0
    %v869 = vadd.f32 0.0, %v868
    %v870 = vpop.f32.mrf.mxu0
    %v871 = vpop.f32.mrf.mxu0
    %v872 = vadd.f32 0.0, %v871
    %v873 = vpop.f32.mrf.mxu0
    %874 = vmatprep.mubr.bf16.mxu0 0
    %875 = vmatmul.mubr.bf16.gmra.mxu0 %v826
    %v876 = vpop.f32.mrf.mxu0
    %v877 = vadd.f32 0.0, %v876
    %v878 = vpop.f32.mrf.mxu0
    %v879 = vpop.f32.mrf.mxu0
    %v880 = vpop.f32.mrf.mxu0
    %881 = vdwg.mxu0
    %v882 = vsel %vm369, %v869, -inf
    %883 = vmax.xlane.f32.xlu0 %v882
    %v884 = vpop.xlane.xlu0 %883
    %v885 = vsel %vm369, %v872, -inf
    %886 = vmax.xlane.f32.xlu0 %v885
    %v887 = vpop.xlane.xlu0 %886
    %v888 = vsel %vm369, %v877, -inf
    %889 = vmax.xlane.f32.xlu0 %v888
    %v890 = vpop.xlane.xlu0 %889
    %v891 = vsub.f32 %v869, %v884
    %v892 = vsub.f32 %v872, %v887
    %v893 = vsub.f32 %v877, %v890
    %v894 = vmul.f32 %v891, 1.442695
    %v895 = vpow.pop %v894
    %v896 = vmul.f32 %v892, 1.442695
    %v897 = vpow.pop %v896
    %v898 = vmul.f32 %v893, 1.442695
    %v899 = vpow.pop %v898
    %v900 = vsel %vm369, %v895, 0.0
    %901 = vadd.xlane.f32.xlu0 %v900
    %v902 = vpop.xlane.xlu0 %901
    %v903 = vsel %vm369, %v897, 0.0
    %904 = vadd.xlane.f32.xlu0 %v903
    %v905 = vpop.xlane.xlu0 %904
    %v906 = vsel %vm369, %v899, 0.0
    %907 = vadd.xlane.f32.xlu0 %v906
    %v908 = vpop.xlane.xlu0 %907
    %v909 = vrcp.pop %v902
    %v910 = vrcp.pop %v905
    %v911 = vrcp.pop %v908
    %v912 = vmul.f32 %v895, %v909
    %v913 = vmul.f32 %v897, %v910
    %v914 = vmul.f32 %v899, %v911
    %v915 = vpack.c.bf16 %v913, %v912
    %v916 = vpack.c.bf16 %v914, %v914
    %917 = vrot.lane.b32.xlu0 %v652, 48
    %v918 = vpop.permute.xlu0 %917
    %919 = vrot.lane.b32.xlu0 %v651, 48
    %v920 = vpop.permute.xlu0 %919
    %v923 = vsel %vm369, %v915, 0
    %v926 = vsel %vm369, %v916, 0
    %v929 = vsel %vm416, %v920, 0
    %931 = vmatprep.subr.bf16.mxu0 0
    %932 = vmatpush1.bf16.msra.mxu0 0
    %933 = vmatprep.subr.bf16.mxu0 0
    %934 = vmatpush1.bf16.msra.mxu0 0
    %935 = vmatprep.subr.bf16.mxu0 0
    %936 = vmatpush1.bf16.msra.mxu0 0
    %937 = vmatprep.subr.bf16.mxu0 0
    %938 = vmatpush1.bf16.msra.mxu0 0
    %939 = vmatprep.subr.bf16.mxu0 0
    %940 = vmatpush1.bf16.msra.mxu0 0
    %941 = vmatprep.subr.bf16.mxu0 0
    %942 = vmatpush1.bf16.msra.mxu0 0
    %943 = vmatprep.subr.bf16.mxu0 0
    %944 = vmatpush1.bf16.msra.mxu0 %v929
    %945 = vmatprep.subr.bf16.mxu0 0
    %946 = vmatpush1.bf16.msra.mxu0 %v918
    %947 = vmatprep.subr.bf16.mxu0 0
    %948 = vmatpush2.bf16.msra.mxu0 0
    %949 = vmatprep.subr.bf16.mxu0 0
    %950 = vmatpush2.bf16.msra.mxu0 0
    %951 = vmatprep.subr.bf16.mxu0 0
    %952 = vmatpush2.bf16.msra.mxu0 0
    %953 = vmatprep.subr.bf16.mxu0 0
    %954 = vmatpush2.bf16.msra.mxu0 0
    %955 = vmatprep.subr.bf16.mxu0 0
    %956 = vmatpush2.bf16.msra.mxu0 0
    %957 = vmatprep.subr.bf16.mxu0 0
    %958 = vmatpush2.bf16.msra.mxu0 0
    %959 = vmatprep.subr.bf16.mxu0 0
    %960 = vmatpush2.bf16.msra.mxu0 0
    %961 = vmatprep.subr.bf16.mxu0 0
    %962 = vmatpush2.bf16.msra.mxu0 0
    %963 = vmatprep.mubr.bf16.mxu0 0
    %964 = vmatmul.mubr.bf16.gmra.mxu0 %v923
    %v965 = vpop.f32.mrf.mxu0
    %v966 = vadd.f32 0.0, %v965
    %v967 = vpop.f32.mrf.mxu0
    %v968 = vpop.f32.mrf.mxu0
    %v969 = vadd.f32 0.0, %v968
    %v970 = vpop.f32.mrf.mxu0
    %971 = vmatprep.mubr.bf16.mxu0 0
    %972 = vmatmul.mubr.bf16.gmra.mxu0 %v926
    %v973 = vpop.f32.mrf.mxu0
    %v974 = vadd.f32 0.0, %v973
    %v975 = vpop.f32.mrf.mxu0
    %v976 = vpop.f32.mrf.mxu0
    %v977 = vpop.f32.mrf.mxu0
    %978 = vdwg.mxu0
    %982 = vrot.lane.b32.xlu0 %v966, 16
    %v983 = vpop.permute.xlu0 %982
    %984 = vrot.lane.b32.xlu0 %v969, 16
    %v985 = vpop.permute.xlu0 %984
    %986 = vrot.lane.b32.xlu0 %v974, 16
    %v987 = vpop.permute.xlu0 %986
    %v991 = vsel %vm70, %v801, %v983
    %v992 = vsel %vm70, %v804, %v985
    %v993 = vsel %vm70, %v809, %v987
    %v994 = vpack.c.bf16 %v646, %v645
    %v995 = vpack.c.bf16 %v991, %v647
    %v996 = vpack.c.bf16 %v993, %v992
    %v997 = vld [vmem:[%s4] sm:$0xf]
    %v998 = vld [vmem:[%s4 + $0x4] sm:$0xf]
    %v999 = vld [vmem:[%s4 + $0x8] sm:$0xf]
    %v1000 = vld [vmem:[%s4 + $0xc] sm:$0xf]
    %v1001 = vlaneseq
    %v1002 = vshrl.u32 %v1001, 7
    %v1003 = vsub.s32 1, %v1002
    %v1004 = vrot.slane %v50, %v1003
    %v1009 = vunpack.c.l.b16 %v997
    %v1010 = vunpack.c.l.b16 %v998
    %v1011 = vunpack.c.l.b16 %v999
    %v1012 = vunpack.c.l.b16 %v1000
    %v1013 = vpack.c.b16 %v1010, %v1009
    %v1014 = vpack.c.b16 %v1012, %v1011
    %v1018 = vsel %vm115, %v994, 0
    %v1021 = vsel %vm115, %v995, 0
    %v1024 = vsel %vm115, %v996, 0
    %1026 = vmatprep.subr.bf16.mxu0 0
    %1027 = vmatpush1.bf16.msra.mxu0 0
    %1028 = vmatprep.subr.bf16.mxu0 0
    %1029 = vmatpush1.bf16.msra.mxu0 0
    %1030 = vmatprep.subr.bf16.mxu0 0
    %1031 = vmatpush1.bf16.msra.mxu0 0
    %1032 = vmatprep.subr.bf16.mxu0 0
    %1033 = vmatpush1.bf16.msra.mxu0 0
    %1034 = vmatprep.subr.bf16.mxu0 0
    %1035 = vmatpush1.bf16.msra.mxu0 0
    %1036 = vmatprep.subr.bf16.mxu0 0
    %1037 = vmatpush1.bf16.msra.mxu0 0
    %1038 = vmatprep.subr.bf16.mxu0 0
    %1039 = vmatpush1.bf16.msra.mxu0 %v1014
    %1040 = vmatprep.subr.bf16.mxu0 0
    %1041 = vmatpush1.bf16.msra.mxu0 %v1013
    %1042 = vmatprep.subr.bf16.mxu0 0
    %1043 = vmatpush2.bf16.msra.mxu0 0
    %1044 = vmatprep.subr.bf16.mxu0 0
    %1045 = vmatpush2.bf16.msra.mxu0 0
    %1046 = vmatprep.subr.bf16.mxu0 0
    %1047 = vmatpush2.bf16.msra.mxu0 0
    %1048 = vmatprep.subr.bf16.mxu0 0
    %1049 = vmatpush2.bf16.msra.mxu0 0
    %1050 = vmatprep.subr.bf16.mxu0 0
    %1051 = vmatpush2.bf16.msra.mxu0 0
    %1052 = vmatprep.subr.bf16.mxu0 0
    %1053 = vmatpush2.bf16.msra.mxu0 0
    %1054 = vmatprep.subr.bf16.mxu0 0
    %1055 = vmatpush2.bf16.msra.mxu0 0
    %1056 = vmatprep.subr.bf16.mxu0 0
    %1057 = vmatpush2.bf16.msra.mxu0 0
    %1058 = vmatprep.mubr.bf16.mxu0 0
    %1059 = vmatmul.mubr.bf16.gmra.mxu0 %v1018
    %v1060 = vpop.f32.mrf.mxu0
    %v1061 = vadd.f32 %v1004, %v1060
    %v1062 = vpop.f32.mrf.mxu0
    %v1063 = vpop.f32.mrf.mxu0
    %v1064 = vadd.f32 %v1004, %v1063
    %v1065 = vpop.f32.mrf.mxu0
    %1066 = vmatprep.mubr.bf16.mxu0 0
    %1067 = vmatmul.mubr.bf16.gmra.mxu0 %v1021
    %v1068 = vpop.f32.mrf.mxu0
    %v1069 = vpop.f32.mrf.mxu0
    %v1070 = vpop.f32.mrf.mxu0
    %v1071 = vadd.f32 %v1004, %v1070
    %v1072 = vpop.f32.mrf.mxu0
    %1073 = vmatprep.mubr.bf16.mxu0 0
    %1074 = vmatmul.mubr.bf16.gmra.mxu0 %v1024
    %v1075 = vpop.f32.mrf.mxu0
    %v1076 = vadd.f32 %v1004, %v1075
    %v1077 = vpop.f32.mrf.mxu0
    %v1078 = vpop.f32.mrf.mxu0
    %v1079 = vpop.f32.mrf.mxu0
    %1080 = vdwg.mxu0
    %s1081 = sld [smem:[#allocation2]]
    %v1082 = vstv %s1081
    %v1083 = vmul.f32 %v1082, %v1061
    %v1084 = vmul.f32 %v1082, %v1064
    %v1085 = vmul.f32 %v1082, %v1071
    %v1086 = vmul.f32 %v1082, %v1076
    %v1087 = vadd.f32 %v51, %v1083
    %v1088 = vadd.f32 %v52, %v1084
    %v1089 = vadd.f32 %v53, %v1085
    %v1090 = vadd.f32 %v54, %v1086
    %v1091 = vsel %vm115, %v1087, 0.0
    %1092 = vadd.xlane.f32.xlu0 %v1091
    %v1093 = vpop.xlane.xlu0 %1092
    %v1094 = vsel %vm115, %v1088, 0.0
    %1095 = vadd.xlane.f32.xlu0 %v1094
    %v1096 = vpop.xlane.xlu0 %1095
    %v1097 = vsel %vm115, %v1089, 0.0
    %1098 = vadd.xlane.f32.xlu0 %v1097
    %v1099 = vpop.xlane.xlu0 %1098
    %v1100 = vsel %vm115, %v1090, 0.0
    %1101 = vadd.xlane.f32.xlu0 %v1100
    %v1102 = vpop.xlane.xlu0 %1101
    %v1103 = vmul.f32 %v1093, %v134
    %v1104 = vmul.f32 %v1096, %v134
    %v1105 = vmul.f32 %v1099, %v134
    %v1106 = vmul.f32 %v1102, %v134
    %v1107 = vsub.f32 %v1087, %v1103
    %v1108 = vsub.f32 %v1088, %v1104
    %v1109 = vsub.f32 %v1089, %v1105
    %v1110 = vsub.f32 %v1090, %v1106
    %v1111 = vmul.f32 %v1107, %v1107
    %v1112 = vmul.f32 %v1108, %v1108
    %v1113 = vmul.f32 %v1109, %v1109
    %v1114 = vmul.f32 %v1110, %v1110
    %v1115 = vsel %vm115, %v1111, 0.0
    %1116 = vadd.xlane.f32.xlu0 %v1115
    %v1117 = vpop.xlane.xlu0 %1116
    %v1118 = vsel %vm115, %v1112, 0.0
    %1119 = vadd.xlane.f32.xlu0 %v1118
    %v1120 = vpop.xlane.xlu0 %1119
    %v1121 = vsel %vm115, %v1113, 0.0
    %1122 = vadd.xlane.f32.xlu0 %v1121
    %v1123 = vpop.xlane.xlu0 %1122
    %v1124 = vsel %vm115, %v1114, 0.0
    %1125 = vadd.xlane.f32.xlu0 %v1124
    %v1126 = vpop.xlane.xlu0 %1125
    %v1127 = vmul.f32 %v1117, %v134
    %v1128 = vmul.f32 %v1120, %v134
    %v1129 = vmul.f32 %v1123, %v134
    %v1130 = vmul.f32 %v1126, %v134
    %v1131 = vadd.f32 %v1127, 1e-05
    %v1132 = vadd.f32 %v1128, 1e-05
    %v1133 = vadd.f32 %v1129, 1e-05
    %v1134 = vadd.f32 %v1130, 1e-05
    %v1135 = vrsqrt.pop %v1131
    %v1136 = vrsqrt.pop %v1132
    %v1137 = vrsqrt.pop %v1133
    %v1138 = vrsqrt.pop %v1134
    %v1139 = vmul.f32 %v1107, %v1135
    %v1140 = vmul.f32 %v1108, %v1136
    %v1141 = vmul.f32 %v1109, %v1137
    %v1142 = vmul.f32 %v1110, %v1138
    %v1143 = vlaneseq
    %v1144 = vshrl.u32 %v1143, 7
    %v1145 = vsub.s32 4, %v1144
    %v1146 = vrot.slane %v50, %v1145
    %v1147 = vmul.f32 %v1139, %v1146
    %v1148 = vmul.f32 %v1140, %v1146
    %v1149 = vmul.f32 %v1141, %v1146
    %v1150 = vmul.f32 %v1142, %v1146
    %v1151 = vlaneseq
    %v1152 = vshrl.u32 %v1151, 7
    %v1153 = vsub.s32 5, %v1152
    %v1154 = vrot.slane %v50, %v1153
    %v1155 = vadd.f32 %v1147, %v1154
    %v1156 = vadd.f32 %v1148, %v1154
    %v1157 = vadd.f32 %v1149, %v1154
    %v1158 = vadd.f32 %v1150, %v1154
    %v1159 = vpack.c.bf16 %v1156, %v1155
    %v1160 = vpack.c.bf16 %v1158, %v1157
    %v1161 = vld [vmem:[%s5] sm:$0xff]
    %v1162 = vld [vmem:[%s5 + $0x8] sm:$0xff]
    %v1163 = vld [vmem:[%s5 + $0x10] sm:$0xff]
    %v1164 = vld [vmem:[%s5 + $0x18] sm:$0xff]
    %v1169 = vunpack.c.l.b16 %v1161
    %v1170 = vunpack.c.h.b16 %v1161
    %v1171 = vunpack.c.l.b16 %v1162
    %v1172 = vunpack.c.h.b16 %v1162
    %v1173 = vunpack.c.l.b16 %v1163
    %v1174 = vunpack.c.h.b16 %v1163
    %v1175 = vunpack.c.l.b16 %v1164
    %v1176 = vunpack.c.h.b16 %v1164
    %v1177 = vpack.c.b16 %v1171, %v1169
    %v1178 = vpack.c.b16 %v1172, %v1170
    %v1179 = vpack.c.b16 %v1175, %v1173
    %v1180 = vpack.c.b16 %v1176, %v1174
    %v1186 = vsel %vm115, %v1159, 0
    %v1189 = vsel %vm115, %v1160, 0
    %1191 = vmatprep.subr.bf16.mxu0 0
    %1192 = vmatpush1.bf16.msra.mxu0 0
    %1193 = vmatprep.subr.bf16.mxu0 0
    %1194 = vmatpush1.bf16.msra.mxu0 0
    %1195 = vmatprep.subr.bf16.mxu0 0
    %1196 = vmatpush1.bf16.msra.mxu0 0
    %1197 = vmatprep.subr.bf16.mxu0 0
    %1198 = vmatpush1.bf16.msra.mxu0 0
    %1199 = vmatprep.subr.bf16.mxu0 0
    %1200 = vmatpush1.bf16.msra.mxu0 0
    %1201 = vmatprep.subr.bf16.mxu0 0
    %1202 = vmatpush1.bf16.msra.mxu0 0
    %1203 = vmatprep.subr.bf16.mxu0 %v1180
    %1204 = vmatpush1.bf16.msra.mxu0 %v1179
    %1205 = vmatprep.subr.bf16.mxu0 %v1178
    %1206 = vmatpush1.bf16.msra.mxu0 %v1177
    %1207 = vmatprep.subr.bf16.mxu0 0
    %1208 = vmatpush2.bf16.msra.mxu0 0
    %1209 = vmatprep.subr.bf16.mxu0 0
    %1210 = vmatpush2.bf16.msra.mxu0 0
    %1211 = vmatprep.subr.bf16.mxu0 0
    %1212 = vmatpush2.bf16.msra.mxu0 0
    %1213 = vmatprep.subr.bf16.mxu0 0
    %1214 = vmatpush2.bf16.msra.mxu0 0
    %1215 = vmatprep.subr.bf16.mxu0 0
    %1216 = vmatpush2.bf16.msra.mxu0 0
    %1217 = vmatprep.subr.bf16.mxu0 0
    %1218 = vmatpush2.bf16.msra.mxu0 0
    %1219 = vmatprep.subr.bf16.mxu0 0
    %1220 = vmatpush2.bf16.msra.mxu0 0
    %1221 = vmatprep.subr.bf16.mxu0 0
    %1222 = vmatpush2.bf16.msra.mxu0 0
    %1223 = vmatprep.mubr.bf16.mxu0 0
    %1224 = vmatmul.mubr.bf16.gmra.mxu0 %v1186
    %v1225 = vpop.f32.mrf.mxu0
    %v1226 = vadd.f32 0.0, %v1225
    %v1227 = vpop.f32.mrf.mxu0
    %v1228 = vadd.f32 0.0, %v1227
    %v1229 = vpop.f32.mrf.mxu0
    %v1230 = vadd.f32 0.0, %v1229
    %v1231 = vpop.f32.mrf.mxu0
    %v1232 = vadd.f32 0.0, %v1231
    %1233 = vmatprep.mubr.bf16.mxu0 0
    %1234 = vmatmul.mubr.bf16.gmra.mxu0 %v1189
    %v1235 = vpop.f32.mrf.mxu0
    %v1236 = vadd.f32 0.0, %v1235
    %v1237 = vpop.f32.mrf.mxu0
    %v1238 = vadd.f32 0.0, %v1237
    %v1239 = vpop.f32.mrf.mxu0
    %v1240 = vadd.f32 0.0, %v1239
    %v1241 = vpop.f32.mrf.mxu0
    %v1242 = vadd.f32 0.0, %v1241
    %1243 = vdwg.mxu0
    %v1244 = vld [vmem:[%s8] sm:$0x1]
    %v1245 = vlaneseq
    %v1246 = vshrl.u32 %v1245, 7
    %v1247 = vsub.s32 0, %v1246
    %v1248 = vrot.slane %v1244, %v1247
    %v1249 = vadd.f32 %v1226, %v1248
    %v1250 = vadd.f32 %v1230, %v1248
    %v1251 = vadd.f32 %v1236, %v1248
    %v1252 = vadd.f32 %v1240, %v1248
    %v1253 = vld [vmem:[%s8 + $0x1] sm:$0x1]
    %v1254 = vlaneseq
    %v1255 = vshrl.u32 %v1254, 7
    %v1256 = vsub.s32 0, %v1255
    %v1257 = vrot.slane %v1253, %v1256
    %v1258 = vadd.f32 %v1228, %v1257
    %v1259 = vadd.f32 %v1232, %v1257
    %v1260 = vadd.f32 %v1238, %v1257
    %v1261 = vadd.f32 %v1242, %v1257
    %v1262 = vmul.f32 %v1258, 0.5
    %v1263 = vmul.f32 %v1259, 0.5
    %v1264 = vmul.f32 %v1260, 0.5
    %v1265 = vmul.f32 %v1261, 0.5
    %v1266 = vmul.f32 %v1258, 0.70710677
    %v1267 = vmul.f32 %v1259, 0.70710677
    %v1268 = vmul.f32 %v1260, 0.70710677
    %v1269 = vmul.f32 %v1261, 0.70710677
    %v1270 = verf.f32.pop %v1266
    %v1271 = verf.f32.pop %v1267
    %v1272 = verf.f32.pop %v1268
    %v1273 = verf.f32.pop %v1269
    %v1274 = vadd.f32 %v1270, 1.0
    %v1275 = vadd.f32 %v1271, 1.0
    %v1276 = vadd.f32 %v1272, 1.0
    %v1277 = vadd.f32 %v1273, 1.0
    %v1278 = vmul.f32 %v1262, %v1274
    %v1279 = vmul.f32 %v1263, %v1275
    %v1280 = vmul.f32 %v1264, %v1276
    %v1281 = vmul.f32 %v1265, %v1277
    %v1282 = vmul.f32 %v1249, %v1278
    %v1283 = vmul.f32 %v1250, %v1279
    %v1284 = vmul.f32 %v1251, %v1280
    %v1285 = vmul.f32 %v1252, %v1281
    %v1286 = vpack.c.bf16 %v1283, %v1282
    %v1287 = vpack.c.bf16 %v1285, %v1284
    %v1288 = vld [vmem:[%s6] sm:$0xf]
    %v1289 = vld [vmem:[%s6 + $0x4] sm:$0xf]
    %v1290 = vld [vmem:[%s6 + $0x8] sm:$0xf]
    %v1291 = vld [vmem:[%s6 + $0xc] sm:$0xf]
    %v1292 = vld [vmem:[%s6 + $0x10] sm:$0xf]
    %v1293 = vld [vmem:[%s6 + $0x14] sm:$0xf]
    %v1294 = vld [vmem:[%s6 + $0x18] sm:$0xf]
    %v1295 = vld [vmem:[%s6 + $0x1c] sm:$0xf]
    %v1296 = vld [vmem:[%s6 + $0x20] sm:$0xf]
    %v1297 = vld [vmem:[%s6 + $0x24] sm:$0xf]
    %v1298 = vld [vmem:[%s6 + $0x28] sm:$0xf]
    %v1299 = vld [vmem:[%s6 + $0x2c] sm:$0xf]
    %v1300 = vld [vmem:[%s6 + $0x30] sm:$0xf]
    %v1301 = vld [vmem:[%s6 + $0x34] sm:$0xf]
    %v1302 = vld [vmem:[%s6 + $0x38] sm:$0xf]
    %v1303 = vld [vmem:[%s6 + $0x3c] sm:$0xf]
    %v1304 = vlaneseq
    %v1305 = vshrl.u32 %v1304, 7
    %v1306 = vsub.s32 6, %v1305
    %v1307 = vrot.slane %v50, %v1306
    %v1324 = vunpack.c.l.b16 %v1288
    %v1325 = vunpack.c.l.b16 %v1289
    %v1326 = vunpack.c.l.b16 %v1290
    %v1327 = vunpack.c.l.b16 %v1291
    %v1328 = vunpack.c.l.b16 %v1292
    %v1329 = vunpack.c.l.b16 %v1293
    %v1330 = vunpack.c.l.b16 %v1294
    %v1331 = vunpack.c.l.b16 %v1295
    %v1332 = vunpack.c.l.b16 %v1296
    %v1333 = vunpack.c.l.b16 %v1297
    %v1334 = vunpack.c.l.b16 %v1298
    %v1335 = vunpack.c.l.b16 %v1299
    %v1336 = vunpack.c.l.b16 %v1300
    %v1337 = vunpack.c.l.b16 %v1301
    %v1338 = vunpack.c.l.b16 %v1302
    %v1339 = vunpack.c.l.b16 %v1303
    %v1340 = vpack.c.b16 %v1325, %v1324
    %v1341 = vpack.c.b16 %v1327, %v1326
    %v1342 = vpack.c.b16 %v1329, %v1328
    %v1343 = vpack.c.b16 %v1331, %v1330
    %v1344 = vpack.c.b16 %v1333, %v1332
    %v1345 = vpack.c.b16 %v1335, %v1334
    %v1346 = vpack.c.b16 %v1337, %v1336
    %v1347 = vpack.c.b16 %v1339, %v1338
    %1356 = vmatprep.subr.bf16.mxu0 0
    %1357 = vmatpush1.bf16.msra.mxu0 %v1347
    %1358 = vmatprep.subr.bf16.mxu0 0
    %1359 = vmatpush1.bf16.msra.mxu0 %v1346
    %1360 = vmatprep.subr.bf16.mxu0 0
    %1361 = vmatpush1.bf16.msra.mxu0 %v1345
    %1362 = vmatprep.subr.bf16.mxu0 0
    %1363 = vmatpush1.bf16.msra.mxu0 %v1344
    %1364 = vmatprep.subr.bf16.mxu0 0
    %1365 = vmatpush1.bf16.msra.mxu0 %v1343
    %1366 = vmatprep.subr.bf16.mxu0 0
    %1367 = vmatpush1.bf16.msra.mxu0 %v1342
    %1368 = vmatprep.subr.bf16.mxu0 0
    %1369 = vmatpush1.bf16.msra.mxu0 %v1341
    %1370 = vmatprep.subr.bf16.mxu0 0
    %1371 = vmatpush1.bf16.msra.mxu0 %v1340
    %1372 = vmatprep.subr.bf16.mxu0 0
    %1373 = vmatpush2.bf16.msra.mxu0 0
    %1374 = vmatprep.subr.bf16.mxu0 0
    %1375 = vmatpush2.bf16.msra.mxu0 0
    %1376 = vmatprep.subr.bf16.mxu0 0
    %1377 = vmatpush2.bf16.msra.mxu0 0
    %1378 = vmatprep.subr.bf16.mxu0 0
    %1379 = vmatpush2.bf16.msra.mxu0 0
    %1380 = vmatprep.subr.bf16.mxu0 0
    %1381 = vmatpush2.bf16.msra.mxu0 0
    %1382 = vmatprep.subr.bf16.mxu0 0
    %1383 = vmatpush2.bf16.msra.mxu0 0
    %1384 = vmatprep.subr.bf16.mxu0 0
    %1385 = vmatpush2.bf16.msra.mxu0 0
    %1386 = vmatprep.subr.bf16.mxu0 0
    %1387 = vmatpush2.bf16.msra.mxu0 0
    %1388 = vmatprep.mubr.bf16.mxu0 0
    %1389 = vmatmul.mubr.bf16.gmra.mxu0 %v1286
    %v1390 = vpop.f32.mrf.mxu0
    %v1391 = vadd.f32 %v1307, %v1390
    %v1392 = vpop.f32.mrf.mxu0
    %v1393 = vpop.f32.mrf.mxu0
    %v1394 = vadd.f32 %v1307, %v1393
    %v1395 = vpop.f32.mrf.mxu0
    %1396 = vmatprep.mubr.bf16.mxu0 0
    %1397 = vmatmul.mubr.bf16.gmra.mxu0 %v1287
    %v1398 = vpop.f32.mrf.mxu0
    %v1399 = vadd.f32 %v1307, %v1398
    %v1400 = vpop.f32.mrf.mxu0
    %v1401 = vpop.f32.mrf.mxu0
    %v1402 = vadd.f32 %v1307, %v1401
    %v1403 = vpop.f32.mrf.mxu0
    %1404 = vdwg.mxu0
    %s1405 = sld [smem:[#allocation2 + $0x1]]
    %v1406 = vstv %s1405
    %v1407 = vmul.f32 %v1406, %v1391
    %v1408 = vmul.f32 %v1406, %v1394
    %v1409 = vmul.f32 %v1406, %v1399
    %v1410 = vmul.f32 %v1406, %v1402
    %v1411 = vadd.f32 %v1087, %v1407
    %v1412 = vadd.f32 %v1088, %v1408
    %v1413 = vadd.f32 %v1089, %v1409
    %v1414 = vadd.f32 %v1090, %v1410
    %1415 = vst.msk [vmem:[#allocation5] sm:$0xff] %vm115, %v1411
    %1416 = vst.msk [vmem:[#allocation5 + $0x8] sm:$0xff] %vm115, %v1412
    %1417 = vst.msk [vmem:[#allocation5 + $0x10] sm:$0xff] %vm115, %v1413
    %1418 = vst.msk [vmem:[#allocation5 + $0x18] sm:$0xff] %vm115, %v1414
    // Predicated region
    $region46: #{gated_self_attention_dense.1} parent=1 // pred_check
      _
    $region47: #{gated_self_attention_dense.1} parent=1 // pred_check_branch
      %1420 = sbr.rel (0) target = $region49
    $region48: #{gated_self_attention_dense.1} parent=1 // pred_region
      %s1422 = ssub.s32 512, 512
      %1423 = vsyncadd [#allocation3], %s1422
      %s1424 = sshll.u32 [#allocation5], 4
      %s1425 = int_to_ptr.vmem [resolvable:$true] %s1424
      %1430 = dma.vmem_to_hbm [thread:$0]  %s1425, 512, %s10, [#allocation3], 128, 128, 8
    $region49: #{gated_self_attention_dense.1} parent=1 // pred_fallthru
      _
    // Predicated region
    $region50: #{gated_self_attention_dense.1} parent=1 // pred_check
      _
    $region51: #{gated_self_attention_dense.1} parent=1 // pred_check_branch
      %1432 = sbr.rel (0) target = $region53
    $region52: #{gated_self_attention_dense.1} parent=1 // pred_region
      %1433 = dma.done [#allocation3], 512
    $region53: #{gated_self_attention_dense.1} parent=1 // pred_fallthru
      _
    %1434 = vsyncpa [#allocation3], 1
    %1435 = vsyncpa [#allocation4], 1

</llo_original>
